<compile_context>
chip_gen: v6e
topology: v6e:2x2x1
jax: 0.10.0
libtpu: 0.0.40
codegen_flags: <defaults>
</compile_context>

<pallas_src>
import functools

import jax
import jax.numpy as jnp
from jax import lax
from jax.experimental import pallas as pl
from jax.experimental.pallas import tpu as pltpu


def _round_up(v, m):
    return (v + m - 1) // m * m


def lstm_head_kernel(x_ref, w_ih_ref, w_hh_ref, b_ref, w_lin_ref, b_lin_ref,
                     out_ref, xp_ref):
    """Whole-sequence LSTM recurrence + Linear head in one kernel invocation.

    x_ref:     (T, Bp, Ip)     time-major input, batch/input padded
    w_ih_ref:  (Ip, 4*Hp)      fused input weights, gate order (i, f, o, g)
    w_hh_ref:  (Hp, 4*Hp)      fused recurrent weights, gate order (i, f, o, g)
    b_ref:     (1, 4*Hp)       fused bias (b_ih + b_hh)
    w_lin_ref: (Hp, Op)        zero-padded Linear head weights
    b_lin_ref: (1, Op)         zero-padded Linear head bias
    out_ref:   (Bp, Op)        lane-dense prediction (valid part [:B, :O])
    xp_ref:    (T*Bp, 4*Hp)    VMEM scratch for the hoisted input projection
    """
    T, Bp, Ip = x_ref.shape
    Hp = w_hh_ref.shape[0]

    # Prologue: one (T*Bp, Ip) x (Ip, 4*Hp) matmul for all timesteps, stored to
    # VMEM scratch so its live range does not span the unrolled recurrence.
    xp_ref[...] = (
        jnp.dot(x_ref[...].reshape(T * Bp, Ip), w_ih_ref[...],
                preferred_element_type=jnp.float32,
                precision=lax.Precision.DEFAULT)
        + b_ref[...]
    )

    h = jnp.zeros((Bp, Hp), jnp.float32)
    c = jnp.zeros((Bp, Hp), jnp.float32)

    # T is tiny (8): fully-unrolled serial recurrence, one fused (Bp, Hp) x
    # (Hp, 4*Hp) MXU matmul per step, lane-aligned 128-wide gate slices.
    for t in range(T):
        gates = xp_ref[t * Bp:(t + 1) * Bp, :] + jnp.dot(
            h, w_hh_ref[...],                      # read VMEM operand per step
            preferred_element_type=jnp.float32,
            precision=lax.Precision.DEFAULT)       # (Bp, 4*Hp)
        # sigmoid(x) = 0.5*(tanh(0.5*x)+1): single EUP op per vreg; i,f,o are
        # one contiguous 3*128-lane slice, g (tanh) is the last 128-lane slice.
        sig = 0.5 * (jnp.tanh(0.5 * gates[:, :3 * Hp]) + 1.0)
        i_g = sig[:, 0 * Hp:1 * Hp]
        f_g = sig[:, 1 * Hp:2 * Hp]
        o_g = sig[:, 2 * Hp:3 * Hp]
        g_g = jnp.tanh(gates[:, 3 * Hp:4 * Hp])
        c = f_g * c + i_g * g_g
        h = o_g * jnp.tanh(c)
        # Padded hidden lanes stay exactly 0: zero pre-activations -> gates
        # 0.5/0, c_pad = 0, h_pad = 0.5*tanh(0) = 0.

    # Fused Linear head: (Bp, Hp) x (Hp, Op) -> lane-dense unmasked store.
    out_ref[...] = (jnp.dot(h, w_lin_ref[...],
                            preferred_element_type=jnp.float32,
                            precision=lax.Precision.DEFAULT)
                    + b_lin_ref[...])


def prepare_params(w_ih, w_hh, b, w_lin, b_lin):
    """One-time weight prep (hoisted out of the per-call path).

    w_ih:  (4, I, H)  gate order (i, f, g, o), pre-transposed
    w_hh:  (4, H, H)
    b:     (4, 1, H)  b_ih + b_hh
    w_lin: (H, O), b_lin: (1, O)
    """
    I = w_ih.shape[1]
    H = w_hh.shape[-1]
    O = w_lin.shape[-1]
    Ip = max(128, _round_up(I, 128))
    Hp = max(128, _round_up(H, 128))
    Op = max(128, _round_up(O, 128))

    order = (0, 1, 3, 2)  # (i, f, g, o) -> (i, f, o, g)

    def fuse(w, rows_p):
        rows = w.shape[1]
        out = jnp.zeros((rows_p, 4 * Hp), jnp.float32)
        for k, g in enumerate(order):
            out = out.at[:rows, k * Hp:k * Hp + H].set(w[g])
        return out

    w_ih_f = fuse(w_ih, Ip)                                    # (Ip, 4*Hp)
    w_hh_f = fuse(w_hh, Hp)                                    # (Hp, 4*Hp)
    b_f = jnp.zeros((1, 4 * Hp), jnp.float32)
    for k, g in enumerate(order):
        b_f = b_f.at[:, k * Hp:k * Hp + H].set(b[g, 0])
    w_lin_p = jnp.zeros((Hp, Op), jnp.float32).at[:H, :O].set(w_lin)
    b_lin_p = jnp.zeros((1, Op), jnp.float32).at[:, :O].set(b_lin)

    return dict(w_ih_f=w_ih_f, w_hh_f=w_hh_f, b_f=b_f,
                w_lin_p=w_lin_p, b_lin_p=b_lin_p)


@functools.partial(jax.jit, static_argnames=("out_features",))
def lstm_forward(x, w_ih_f, w_hh_f, b_f, w_lin_p, b_lin_p, *, out_features):
    """nn.LSTM(batch_first=True) with zero initial state + Linear on last h."""
    B, T, I = x.shape
    Ip = w_ih_f.shape[0]
    Hp = w_hh_f.shape[0]
    Op = w_lin_p.shape[1]
    Bp = max(8, _round_up(B, 8))                    # unmasked (8,128) f32 tiles

    # Time-major, padded input: single transpose + pad (no zeros + scatter).
    x_tm = jnp.transpose(x, (1, 0, 2)).astype(jnp.float32)     # (T, B, I)
    x_pad = jnp.pad(x_tm, ((0, 0), (0, Bp - B), (0, Ip - I)))  # (T, Bp, Ip)

    out = pl.pallas_call(
        lstm_head_kernel,
        out_shape=jax.ShapeDtypeStruct((Bp, Op), jnp.float32),
        in_specs=[pl.BlockSpec(memory_space=pltpu.MemorySpace.VMEM)] * 6,
        out_specs=pl.BlockSpec(memory_space=pltpu.MemorySpace.VMEM),
        scratch_shapes=[pltpu.VMEM((T * Bp, 4 * Hp), jnp.float32)],
    )(x_pad, w_ih_f, w_hh_f, b_f, w_lin_p, b_lin_p)

    return out[:B, :out_features]


def ref_forward(x, w_ih, w_hh, b, w_lin, b_lin):
    """Pure-JAX reference matching PyTorch nn.LSTM + Linear semantics."""
    B, T, I = x.shape
    H = w_hh.shape[-1]
    h = jnp.zeros((B, H), jnp.float32)
    c = jnp.zeros((B, H), jnp.float32)
    for t in range(T):
        xt = x[:, t, :]
        i = jax.nn.sigmoid(xt @ w_ih[0] + h @ w_hh[0] + b[0])
        f = jax.nn.sigmoid(xt @ w_ih[1] + h @ w_hh[1] + b[1])
        g = jnp.tanh(xt @ w_ih[2] + h @ w_hh[2] + b[2])
        o = jax.nn.sigmoid(xt @ w_ih[3] + h @ w_hh[3] + b[3])
        c = f * c + i * g
        h = o * jnp.tanh(c)
    return h @ w_lin + b_lin


if __name__ == "__main__":
    # Shapes implied by the module: input_size=6, hidden_layer_size=100, output_size=1.
    B, T, I, H, O = 2, 8, 6, 100, 1

    key = jax.random.PRNGKey(0)
    kx, k1, k2, k3, k4, k5, k6 = jax.random.split(key, 7)
    bound = 1.0 / jnp.sqrt(H)  # PyTorch-style uniform(-1/sqrt(H), 1/sqrt(H))

    x = jax.random.normal(kx, (B, T, I), dtype=jnp.float32)
    w_ih = jax.random.uniform(k1, (4, I, H), jnp.float32, -bound, bound)
    w_hh = jax.random.uniform(k2, (4, H, H), jnp.float32, -bound, bound)
    b_ih = jax.random.uniform(k3, (4, 1, H), jnp.float32, -bound, bound)
    b_hh = jax.random.uniform(k4, (4, 1, H), jnp.float32, -bound, bound)
    b = b_ih + b_hh
    w_lin = jax.random.uniform(k5, (H, O), jnp.float32, -bound, bound)
    b_lin = jax.random.uniform(k6, (1, O), jnp.float32, -bound, bound)

    # One-time weight prep (not on the per-call path).
    params = prepare_params(w_ih, w_hh, b, w_lin, b_lin)
    params = jax.tree_util.tree_map(jax.block_until_ready, params)

    out = lstm_forward(x, **params, out_features=O)
    out = jax.block_until_ready(out)

    ref = ref_forward(x, w_ih, w_hh, b, w_lin, b_lin)
    assert out.shape == (B, O), out.shape
    # Default-precision MXU matmuls use bf16-input passes -> not bit-exact vs f32 ref.
    assert jnp.allclose(out, ref, atol=1e-3, rtol=1e-3), (out, ref)

    print("KERNEL_OK")
</pallas_src>

<mosaic_0001>
module attributes {stable_mosaic.version = 11 : i64} {
  func.func @lstm_head_kernel(%arg0: memref<8x8x128xf32, #tpu.memory_space<vmem>>, %arg1: memref<128x512xf32, #tpu.memory_space<vmem>>, %arg2: memref<128x512xf32, #tpu.memory_space<vmem>>, %arg3: memref<1x512xf32, #tpu.memory_space<vmem>>, %arg4: memref<128x128xf32, #tpu.memory_space<vmem>>, %arg5: memref<1x128xf32, #tpu.memory_space<vmem>>, %arg6: memref<8x128xf32, #tpu.memory_space<vmem>>, %arg7: memref<64x512xf32, #tpu.memory_space<vmem>>) attributes {dimension_semantics = [], scalar_prefetch = 0 : i64, scratch_operands = 1 : i64, tpu.core_type = #tpu.core_type<tc>} {
    %c0 = arith.constant 0 : index
    %c0_0 = arith.constant 0 : index
    %c0_1 = arith.constant 0 : index
    %0 = vector.load %arg0[%c0, %c0_0, %c0_1] : memref<8x8x128xf32, #tpu.memory_space<vmem>>, vector<8x8x128xf32>
    %1 = vector.shape_cast %0 : vector<8x8x128xf32> to vector<64x128xf32>
    %c0_2 = arith.constant 0 : index
    %c0_3 = arith.constant 0 : index
    %2 = vector.load %arg1[%c0_2, %c0_3] : memref<128x512xf32, #tpu.memory_space<vmem>>, vector<128x512xf32>
    %cst = arith.constant dense<0.000000e+00> : vector<64x512xf32>
    %3 = tpu.matmul %1, %2, %cst {dimension_numbers = #tpu.dot_dimension_numbers<[1], [0], [0], [1], [0, 0, 1, 1], [], []>} : vector<64x128xf32>, vector<128x512xf32>, vector<64x512xf32> -> vector<64x512xf32>
    %c0_4 = arith.constant 0 : index
    %c0_5 = arith.constant 0 : index
    %4 = vector.load %arg3[%c0_4, %c0_5] : memref<1x512xf32, #tpu.memory_space<vmem>>, vector<1x512xf32>
    %5 = vector.broadcast %4 : vector<1x512xf32> to vector<64x512xf32>
    %6 = arith.addf %3, %5 : vector<64x512xf32>
    %c0_6 = arith.constant 0 : index
    %c0_7 = arith.constant 0 : index
    %7 = vector.load %arg7[%c0_6, %c0_7] : memref<64x512xf32, #tpu.memory_space<vmem>>, vector<64x512xf32>
    tpu.vector_store %arg7[%c0_6, %c0_7], %6 {strides = array<i32>} : memref<64x512xf32, #tpu.memory_space<vmem>>, vector<64x512xf32>,
    %cst_8 = arith.constant 0.000000e+00 : f32
    %8 = vector.broadcast %cst_8 : f32 to vector<8x128xf32>
    %cst_9 = arith.constant 0.000000e+00 : f32
    %9 = vector.broadcast %cst_9 : f32 to vector<8x128xf32>
    %c0_10 = arith.constant 0 : index
    %c0_11 = arith.constant 0 : index
    %10 = vector.load %arg7[%c0_10, %c0_11] : memref<64x512xf32, #tpu.memory_space<vmem>>, vector<8x512xf32>
    %c0_12 = arith.constant 0 : index
    %c0_13 = arith.constant 0 : index
    %11 = vector.load %arg2[%c0_12, %c0_13] : memref<128x512xf32, #tpu.memory_space<vmem>>, vector<128x512xf32>
    %cst_14 = arith.constant dense<0.000000e+00> : vector<8x512xf32>
    %12 = tpu.matmul %8, %11, %cst_14 {dimension_numbers = #tpu.dot_dimension_numbers<[1], [0], [0], [1], [0, 0, 1, 1], [], []>} : vector<8x128xf32>, vector<128x512xf32>, vector<8x512xf32> -> vector<8x512xf32>
    %13 = arith.addf %10, %12 : vector<8x512xf32>
    %14 = vector.extract_strided_slice %13 {offsets = [0, 0], sizes = [8, 384], strides = [1, 1]} : vector<8x512xf32> to vector<8x384xf32>
    %cst_15 = arith.constant 5.000000e-01 : f32
    %15 = vector.broadcast %cst_15 : f32 to vector<8x384xf32>
    %16 = arith.mulf %15, %14 : vector<8x384xf32>
    %17 = math.tanh %16 : vector<8x384xf32>
    %cst_16 = arith.constant 1.000000e+00 : f32
    %18 = vector.broadcast %cst_16 : f32 to vector<8x384xf32>
    %19 = arith.addf %17, %18 : vector<8x384xf32>
    %cst_17 = arith.constant 5.000000e-01 : f32
    %20 = vector.broadcast %cst_17 : f32 to vector<8x384xf32>
    %21 = arith.mulf %20, %19 : vector<8x384xf32>
    %22 = vector.extract_strided_slice %21 {offsets = [0, 0], sizes = [8, 128], strides = [1, 1]} : vector<8x384xf32> to vector<8x128xf32>
    %23 = vector.extract_strided_slice %21 {offsets = [0, 128], sizes = [8, 128], strides = [1, 1]} : vector<8x384xf32> to vector<8x128xf32>
    %24 = vector.extract_strided_slice %21 {offsets = [0, 256], sizes = [8, 128], strides = [1, 1]} : vector<8x384xf32> to vector<8x128xf32>
    %25 = vector.extract_strided_slice %13 {offsets = [0, 384], sizes = [8, 128], strides = [1, 1]} : vector<8x512xf32> to vector<8x128xf32>
    %26 = math.tanh %25 : vector<8x128xf32>
    %27 = arith.mulf %23, %9 : vector<8x128xf32>
    %28 = arith.mulf %22, %26 : vector<8x128xf32>
    %29 = arith.addf %27, %28 : vector<8x128xf32>
    %30 = math.tanh %29 : vector<8x128xf32>
    %31 = arith.mulf %24, %30 : vector<8x128xf32>
    %c8 = arith.constant 8 : index
    %c0_18 = arith.constant 0 : index
    %32 = vector.load %arg7[%c8, %c0_18] : memref<64x512xf32, #tpu.memory_space<vmem>>, vector<8x512xf32>
    %c0_19 = arith.constant 0 : index
    %c0_20 = arith.constant 0 : index
    %33 = vector.load %arg2[%c0_19, %c0_20] : memref<128x512xf32, #tpu.memory_space<vmem>>, vector<128x512xf32>
    %cst_21 = arith.constant dense<0.000000e+00> : vector<8x512xf32>
    %34 = tpu.matmul %31, %33, %cst_21 {dimension_numbers = #tpu.dot_dimension_numbers<[1], [0], [0], [1], [0, 0, 1, 1], [], []>} : vector<8x128xf32>, vector<128x512xf32>, vector<8x512xf32> -> vector<8x512xf32>
    %35 = arith.addf %32, %34 : vector<8x512xf32>
    %36 = vector.extract_strided_slice %35 {offsets = [0, 0], sizes = [8, 384], strides = [1, 1]} : vector<8x512xf32> to vector<8x384xf32>
    %cst_22 = arith.constant 5.000000e-01 : f32
    %37 = vector.broadcast %cst_22 : f32 to vector<8x384xf32>
    %38 = arith.mulf %37, %36 : vector<8x384xf32>
    %39 = math.tanh %38 : vector<8x384xf32>
    %cst_23 = arith.constant 1.000000e+00 : f32
    %40 = vector.broadcast %cst_23 : f32 to vector<8x384xf32>
    %41 = arith.addf %39, %40 : vector<8x384xf32>
    %cst_24 = arith.constant 5.000000e-01 : f32
    %42 = vector.broadcast %cst_24 : f32 to vector<8x384xf32>
    %43 = arith.mulf %42, %41 : vector<8x384xf32>
    %44 = vector.extract_strided_slice %43 {offsets = [0, 0], sizes = [8, 128], strides = [1, 1]} : vector<8x384xf32> to vector<8x128xf32>
    %45 = vector.extract_strided_slice %43 {offsets = [0, 128], sizes = [8, 128], strides = [1, 1]} : vector<8x384xf32> to vector<8x128xf32>
    %46 = vector.extract_strided_slice %43 {offsets = [0, 256], sizes = [8, 128], strides = [1, 1]} : vector<8x384xf32> to vector<8x128xf32>
    %47 = vector.extract_strided_slice %35 {offsets = [0, 384], sizes = [8, 128], strides = [1, 1]} : vector<8x512xf32> to vector<8x128xf32>
    %48 = math.tanh %47 : vector<8x128xf32>
    %49 = arith.mulf %45, %29 : vector<8x128xf32>
    %50 = arith.mulf %44, %48 : vector<8x128xf32>
    %51 = arith.addf %49, %50 : vector<8x128xf32>
    %52 = math.tanh %51 : vector<8x128xf32>
    %53 = arith.mulf %46, %52 : vector<8x128xf32>
    %c16 = arith.constant 16 : index
    %c0_25 = arith.constant 0 : index
    %54 = vector.load %arg7[%c16, %c0_25] : memref<64x512xf32, #tpu.memory_space<vmem>>, vector<8x512xf32>
    %c0_26 = arith.constant 0 : index
    %c0_27 = arith.constant 0 : index
    %55 = vector.load %arg2[%c0_26, %c0_27] : memref<128x512xf32, #tpu.memory_space<vmem>>, vector<128x512xf32>
    %cst_28 = arith.constant dense<0.000000e+00> : vector<8x512xf32>
    %56 = tpu.matmul %53, %55, %cst_28 {dimension_numbers = #tpu.dot_dimension_numbers<[1], [0], [0], [1], [0, 0, 1, 1], [], []>} : vector<8x128xf32>, vector<128x512xf32>, vector<8x512xf32> -> vector<8x512xf32>
    %57 = arith.addf %54, %56 : vector<8x512xf32>
    %58 = vector.extract_strided_slice %57 {offsets = [0, 0], sizes = [8, 384], strides = [1, 1]} : vector<8x512xf32> to vector<8x384xf32>
    %cst_29 = arith.constant 5.000000e-01 : f32
    %59 = vector.broadcast %cst_29 : f32 to vector<8x384xf32>
    %60 = arith.mulf %59, %58 : vector<8x384xf32>
    %61 = math.tanh %60 : vector<8x384xf32>
    %cst_30 = arith.constant 1.000000e+00 : f32
    %62 = vector.broadcast %cst_30 : f32 to vector<8x384xf32>
    %63 = arith.addf %61, %62 : vector<8x384xf32>
    %cst_31 = arith.constant 5.000000e-01 : f32
    %64 = vector.broadcast %cst_31 : f32 to vector<8x384xf32>
    %65 = arith.mulf %64, %63 : vector<8x384xf32>
    %66 = vector.extract_strided_slice %65 {offsets = [0, 0], sizes = [8, 128], strides = [1, 1]} : vector<8x384xf32> to vector<8x128xf32>
    %67 = vector.extract_strided_slice %65 {offsets = [0, 128], sizes = [8, 128], strides = [1, 1]} : vector<8x384xf32> to vector<8x128xf32>
    %68 = vector.extract_strided_slice %65 {offsets = [0, 256], sizes = [8, 128], strides = [1, 1]} : vector<8x384xf32> to vector<8x128xf32>
    %69 = vector.extract_strided_slice %57 {offsets = [0, 384], sizes = [8, 128], strides = [1, 1]} : vector<8x512xf32> to vector<8x128xf32>
    %70 = math.tanh %69 : vector<8x128xf32>
    %71 = arith.mulf %67, %51 : vector<8x128xf32>
    %72 = arith.mulf %66, %70 : vector<8x128xf32>
    %73 = arith.addf %71, %72 : vector<8x128xf32>
    %74 = math.tanh %73 : vector<8x128xf32>
    %75 = arith.mulf %68, %74 : vector<8x128xf32>
    %c24 = arith.constant 24 : index
    %c0_32 = arith.constant 0 : index
    %76 = vector.load %arg7[%c24, %c0_32] : memref<64x512xf32, #tpu.memory_space<vmem>>, vector<8x512xf32>
    %c0_33 = arith.constant 0 : index
    %c0_34 = arith.constant 0 : index
    %77 = vector.load %arg2[%c0_33, %c0_34] : memref<128x512xf32, #tpu.memory_space<vmem>>, vector<128x512xf32>
    %cst_35 = arith.constant dense<0.000000e+00> : vector<8x512xf32>
    %78 = tpu.matmul %75, %77, %cst_35 {dimension_numbers = #tpu.dot_dimension_numbers<[1], [0], [0], [1], [0, 0, 1, 1], [], []>} : vector<8x128xf32>, vector<128x512xf32>, vector<8x512xf32> -> vector<8x512xf32>
    %79 = arith.addf %76, %78 : vector<8x512xf32>
    %80 = vector.extract_strided_slice %79 {offsets = [0, 0], sizes = [8, 384], strides = [1, 1]} : vector<8x512xf32> to vector<8x384xf32>
    %cst_36 = arith.constant 5.000000e-01 : f32
    %81 = vector.broadcast %cst_36 : f32 to vector<8x384xf32>
    %82 = arith.mulf %81, %80 : vector<8x384xf32>
    %83 = math.tanh %82 : vector<8x384xf32>
    %cst_37 = arith.constant 1.000000e+00 : f32
    %84 = vector.broadcast %cst_37 : f32 to vector<8x384xf32>
    %85 = arith.addf %83, %84 : vector<8x384xf32>
    %cst_38 = arith.constant 5.000000e-01 : f32
    %86 = vector.broadcast %cst_38 : f32 to vector<8x384xf32>
    %87 = arith.mulf %86, %85 : vector<8x384xf32>
    %88 = vector.extract_strided_slice %87 {offsets = [0, 0], sizes = [8, 128], strides = [1, 1]} : vector<8x384xf32> to vector<8x128xf32>
    %89 = vector.extract_strided_slice %87 {offsets = [0, 128], sizes = [8, 128], strides = [1, 1]} : vector<8x384xf32> to vector<8x128xf32>
    %90 = vector.extract_strided_slice %87 {offsets = [0, 256], sizes = [8, 128], strides = [1, 1]} : vector<8x384xf32> to vector<8x128xf32>
    %91 = vector.extract_strided_slice %79 {offsets = [0, 384], sizes = [8, 128], strides = [1, 1]} : vector<8x512xf32> to vector<8x128xf32>
    %92 = math.tanh %91 : vector<8x128xf32>
    %93 = arith.mulf %89, %73 : vector<8x128xf32>
    %94 = arith.mulf %88, %92 : vector<8x128xf32>
    %95 = arith.addf %93, %94 : vector<8x128xf32>
    %96 = math.tanh %95 : vector<8x128xf32>
    %97 = arith.mulf %90, %96 : vector<8x128xf32>
    %c32 = arith.constant 32 : index
    %c0_39 = arith.constant 0 : index
    %98 = vector.load %arg7[%c32, %c0_39] : memref<64x512xf32, #tpu.memory_space<vmem>>, vector<8x512xf32>
    %c0_40 = arith.constant 0 : index
    %c0_41 = arith.constant 0 : index
    %99 = vector.load %arg2[%c0_40, %c0_41] : memref<128x512xf32, #tpu.memory_space<vmem>>, vector<128x512xf32>
    %cst_42 = arith.constant dense<0.000000e+00> : vector<8x512xf32>
    %100 = tpu.matmul %97, %99, %cst_42 {dimension_numbers = #tpu.dot_dimension_numbers<[1], [0], [0], [1], [0, 0, 1, 1], [], []>} : vector<8x128xf32>, vector<128x512xf32>, vector<8x512xf32> -> vector<8x512xf32>
    %101 = arith.addf %98, %100 : vector<8x512xf32>
    %102 = vector.extract_strided_slice %101 {offsets = [0, 0], sizes = [8, 384], strides = [1, 1]} : vector<8x512xf32> to vector<8x384xf32>
    %cst_43 = arith.constant 5.000000e-01 : f32
    %103 = vector.broadcast %cst_43 : f32 to vector<8x384xf32>
    %104 = arith.mulf %103, %102 : vector<8x384xf32>
    %105 = math.tanh %104 : vector<8x384xf32>
    %cst_44 = arith.constant 1.000000e+00 : f32
    %106 = vector.broadcast %cst_44 : f32 to vector<8x384xf32>
    %107 = arith.addf %105, %106 : vector<8x384xf32>
    %cst_45 = arith.constant 5.000000e-01 : f32
    %108 = vector.broadcast %cst_45 : f32 to vector<8x384xf32>
    %109 = arith.mulf %108, %107 : vector<8x384xf32>
    %110 = vector.extract_strided_slice %109 {offsets = [0, 0], sizes = [8, 128], strides = [1, 1]} : vector<8x384xf32> to vector<8x128xf32>
    %111 = vector.extract_strided_slice %109 {offsets = [0, 128], sizes = [8, 128], strides = [1, 1]} : vector<8x384xf32> to vector<8x128xf32>
    %112 = vector.extract_strided_slice %109 {offsets = [0, 256], sizes = [8, 128], strides = [1, 1]} : vector<8x384xf32> to vector<8x128xf32>
    %113 = vector.extract_strided_slice %101 {offsets = [0, 384], sizes = [8, 128], strides = [1, 1]} : vector<8x512xf32> to vector<8x128xf32>
    %114 = math.tanh %113 : vector<8x128xf32>
    %115 = arith.mulf %111, %95 : vector<8x128xf32>
    %116 = arith.mulf %110, %114 : vector<8x128xf32>
    %117 = arith.addf %115, %116 : vector<8x128xf32>
    %118 = math.tanh %117 : vector<8x128xf32>
    %119 = arith.mulf %112, %118 : vector<8x128xf32>
    %c40 = arith.constant 40 : index
    %c0_46 = arith.constant 0 : index
    %120 = vector.load %arg7[%c40, %c0_46] : memref<64x512xf32, #tpu.memory_space<vmem>>, vector<8x512xf32>
    %c0_47 = arith.constant 0 : index
    %c0_48 = arith.constant 0 : index
    %121 = vector.load %arg2[%c0_47, %c0_48] : memref<128x512xf32, #tpu.memory_space<vmem>>, vector<128x512xf32>
    %cst_49 = arith.constant dense<0.000000e+00> : vector<8x512xf32>
    %122 = tpu.matmul %119, %121, %cst_49 {dimension_numbers = #tpu.dot_dimension_numbers<[1], [0], [0], [1], [0, 0, 1, 1], [], []>} : vector<8x128xf32>, vector<128x512xf32>, vector<8x512xf32> -> vector<8x512xf32>
    %123 = arith.addf %120, %122 : vector<8x512xf32>
    %124 = vector.extract_strided_slice %123 {offsets = [0, 0], sizes = [8, 384], strides = [1, 1]} : vector<8x512xf32> to vector<8x384xf32>
    %cst_50 = arith.constant 5.000000e-01 : f32
    %125 = vector.broadcast %cst_50 : f32 to vector<8x384xf32>
    %126 = arith.mulf %125, %124 : vector<8x384xf32>
    %127 = math.tanh %126 : vector<8x384xf32>
    %cst_51 = arith.constant 1.000000e+00 : f32
    %128 = vector.broadcast %cst_51 : f32 to vector<8x384xf32>
    %129 = arith.addf %127, %128 : vector<8x384xf32>
    %cst_52 = arith.constant 5.000000e-01 : f32
    %130 = vector.broadcast %cst_52 : f32 to vector<8x384xf32>
    %131 = arith.mulf %130, %129 : vector<8x384xf32>
    %132 = vector.extract_strided_slice %131 {offsets = [0, 0], sizes = [8, 128], strides = [1, 1]} : vector<8x384xf32> to vector<8x128xf32>
    %133 = vector.extract_strided_slice %131 {offsets = [0, 128], sizes = [8, 128], strides = [1, 1]} : vector<8x384xf32> to vector<8x128xf32>
    %134 = vector.extract_strided_slice %131 {offsets = [0, 256], sizes = [8, 128], strides = [1, 1]} : vector<8x384xf32> to vector<8x128xf32>
    %135 = vector.extract_strided_slice %123 {offsets = [0, 384], sizes = [8, 128], strides = [1, 1]} : vector<8x512xf32> to vector<8x128xf32>
    %136 = math.tanh %135 : vector<8x128xf32>
    %137 = arith.mulf %133, %117 : vector<8x128xf32>
    %138 = arith.mulf %132, %136 : vector<8x128xf32>
    %139 = arith.addf %137, %138 : vector<8x128xf32>
    %140 = math.tanh %139 : vector<8x128xf32>
    %141 = arith.mulf %134, %140 : vector<8x128xf32>
    %c48 = arith.constant 48 : index
    %c0_53 = arith.constant 0 : index
    %142 = vector.load %arg7[%c48, %c0_53] : memref<64x512xf32, #tpu.memory_space<vmem>>, vector<8x512xf32>
    %c0_54 = arith.constant 0 : index
    %c0_55 = arith.constant 0 : index
    %143 = vector.load %arg2[%c0_54, %c0_55] : memref<128x512xf32, #tpu.memory_space<vmem>>, vector<128x512xf32>
    %cst_56 = arith.constant dense<0.000000e+00> : vector<8x512xf32>
    %144 = tpu.matmul %141, %143, %cst_56 {dimension_numbers = #tpu.dot_dimension_numbers<[1], [0], [0], [1], [0, 0, 1, 1], [], []>} : vector<8x128xf32>, vector<128x512xf32>, vector<8x512xf32> -> vector<8x512xf32>
    %145 = arith.addf %142, %144 : vector<8x512xf32>
    %146 = vector.extract_strided_slice %145 {offsets = [0, 0], sizes = [8, 384], strides = [1, 1]} : vector<8x512xf32> to vector<8x384xf32>
    %cst_57 = arith.constant 5.000000e-01 : f32
    %147 = vector.broadcast %cst_57 : f32 to vector<8x384xf32>
    %148 = arith.mulf %147, %146 : vector<8x384xf32>
    %149 = math.tanh %148 : vector<8x384xf32>
    %cst_58 = arith.constant 1.000000e+00 : f32
    %150 = vector.broadcast %cst_58 : f32 to vector<8x384xf32>
    %151 = arith.addf %149, %150 : vector<8x384xf32>
    %cst_59 = arith.constant 5.000000e-01 : f32
    %152 = vector.broadcast %cst_59 : f32 to vector<8x384xf32>
    %153 = arith.mulf %152, %151 : vector<8x384xf32>
    %154 = vector.extract_strided_slice %153 {offsets = [0, 0], sizes = [8, 128], strides = [1, 1]} : vector<8x384xf32> to vector<8x128xf32>
    %155 = vector.extract_strided_slice %153 {offsets = [0, 128], sizes = [8, 128], strides = [1, 1]} : vector<8x384xf32> to vector<8x128xf32>
    %156 = vector.extract_strided_slice %153 {offsets = [0, 256], sizes = [8, 128], strides = [1, 1]} : vector<8x384xf32> to vector<8x128xf32>
    %157 = vector.extract_strided_slice %145 {offsets = [0, 384], sizes = [8, 128], strides = [1, 1]} : vector<8x512xf32> to vector<8x128xf32>
    %158 = math.tanh %157 : vector<8x128xf32>
    %159 = arith.mulf %155, %139 : vector<8x128xf32>
    %160 = arith.mulf %154, %158 : vector<8x128xf32>
    %161 = arith.addf %159, %160 : vector<8x128xf32>
    %162 = math.tanh %161 : vector<8x128xf32>
    %163 = arith.mulf %156, %162 : vector<8x128xf32>
    %c56 = arith.constant 56 : index
    %c0_60 = arith.constant 0 : index
    %164 = vector.load %arg7[%c56, %c0_60] : memref<64x512xf32, #tpu.memory_space<vmem>>, vector<8x512xf32>
    %c0_61 = arith.constant 0 : index
    %c0_62 = arith.constant 0 : index
    %165 = vector.load %arg2[%c0_61, %c0_62] : memref<128x512xf32, #tpu.memory_space<vmem>>, vector<128x512xf32>
    %cst_63 = arith.constant dense<0.000000e+00> : vector<8x512xf32>
    %166 = tpu.matmul %163, %165, %cst_63 {dimension_numbers = #tpu.dot_dimension_numbers<[1], [0], [0], [1], [0, 0, 1, 1], [], []>} : vector<8x128xf32>, vector<128x512xf32>, vector<8x512xf32> -> vector<8x512xf32>
    %167 = arith.addf %164, %166 : vector<8x512xf32>
    %168 = vector.extract_strided_slice %167 {offsets = [0, 0], sizes = [8, 384], strides = [1, 1]} : vector<8x512xf32> to vector<8x384xf32>
    %cst_64 = arith.constant 5.000000e-01 : f32
    %169 = vector.broadcast %cst_64 : f32 to vector<8x384xf32>
    %170 = arith.mulf %169, %168 : vector<8x384xf32>
    %171 = math.tanh %170 : vector<8x384xf32>
    %cst_65 = arith.constant 1.000000e+00 : f32
    %172 = vector.broadcast %cst_65 : f32 to vector<8x384xf32>
    %173 = arith.addf %171, %172 : vector<8x384xf32>
    %cst_66 = arith.constant 5.000000e-01 : f32
    %174 = vector.broadcast %cst_66 : f32 to vector<8x384xf32>
    %175 = arith.mulf %174, %173 : vector<8x384xf32>
    %176 = vector.extract_strided_slice %175 {offsets = [0, 0], sizes = [8, 128], strides = [1, 1]} : vector<8x384xf32> to vector<8x128xf32>
    %177 = vector.extract_strided_slice %175 {offsets = [0, 128], sizes = [8, 128], strides = [1, 1]} : vector<8x384xf32> to vector<8x128xf32>
    %178 = vector.extract_strided_slice %175 {offsets = [0, 256], sizes = [8, 128], strides = [1, 1]} : vector<8x384xf32> to vector<8x128xf32>
    %179 = vector.extract_strided_slice %167 {offsets = [0, 384], sizes = [8, 128], strides = [1, 1]} : vector<8x512xf32> to vector<8x128xf32>
    %180 = math.tanh %179 : vector<8x128xf32>
    %181 = arith.mulf %177, %161 : vector<8x128xf32>
    %182 = arith.mulf %176, %180 : vector<8x128xf32>
    %183 = arith.addf %181, %182 : vector<8x128xf32>
    %184 = math.tanh %183 : vector<8x128xf32>
    %185 = arith.mulf %178, %184 : vector<8x128xf32>
    %c0_67 = arith.constant 0 : index
    %c0_68 = arith.constant 0 : index
    %186 = vector.load %arg4[%c0_67, %c0_68] : memref<128x128xf32, #tpu.memory_space<vmem>>, vector<128x128xf32>
    %cst_69 = arith.constant dense<0.000000e+00> : vector<8x128xf32>
    %187 = tpu.matmul %185, %186, %cst_69 {dimension_numbers = #tpu.dot_dimension_numbers<[1], [0], [0], [1], [0, 0, 1, 1], [], []>} : vector<8x128xf32>, vector<128x128xf32>, vector<8x128xf32> -> vector<8x128xf32>
    %c0_70 = arith.constant 0 : index
    %c0_71 = arith.constant 0 : index
    %188 = vector.load %arg5[%c0_70, %c0_71] : memref<1x128xf32, #tpu.memory_space<vmem>>, vector<1x128xf32>
    %189 = vector.broadcast %188 : vector<1x128xf32> to vector<8x128xf32>
    %190 = arith.addf %187, %189 : vector<8x128xf32>
    %c0_72 = arith.constant 0 : index
    %c0_73 = arith.constant 0 : index
    %191 = vector.load %arg6[%c0_72, %c0_73] : memref<8x128xf32, #tpu.memory_space<vmem>>, vector<8x128xf32>
    tpu.vector_store %arg6[%c0_72, %c0_73], %190 {strides = array<i32>} : memref<8x128xf32, #tpu.memory_space<vmem>>, vector<8x128xf32>,
    return
  }
}

</mosaic_0001>

<llo_original>
// kernel: lstm_forward.1
$region0: #{lstm_forward.1}
  #allocation0 [shape = 'u32[]', space=smem, size = 0x4, offset = 0x4, fixed_abs, tag = 'smem constant byte address 0x4 - core index']
  #allocation1 [shape = 'u32[144,128]{1,0:T(1,128)}', space=vmem, size = 0x12000, scoped, tag = 'internal scratch']
  #allocation2 [shape = 'f32[64,512]{1,0:T(8,128)}', space=vmem, size = 0x20000, scoped, tag = 'scratch operand']
  %s0 = inlined_call_operand.vmem [shape: f32[8,8,128], index: 0, kind: input, shape index: {}]
  %s1 = inlined_call_operand.hbm [shape: f32[128,512], index: 1, kind: input, shape index: {}]
  %s2 = inlined_call_operand.hbm [shape: f32[128,512], index: 2, kind: input, shape index: {}]
  %s3 = inlined_call_operand.vmem [shape: f32[1,512], index: 3, kind: input, shape index: {}]
  %s4 = inlined_call_operand.hbm [shape: f32[128,128], index: 4, kind: input, shape index: {}]
  %s5 = inlined_call_operand.vmem [shape: f32[1,128], index: 5, kind: input, shape index: {}]
  %s6 = inlined_call_operand.vmem [shape: f32[8,128], index: 6, kind: output, shape index: {}]
  %s7 = sld [smem:[#allocation0]]
  $region46: #{lstm_forward.1} parent=0
    _
  %s9 = ssub.s32 1, %s7
  %s10 = scalar_select 0, %s9, %s7
  $region1: #{lstm_forward.1} parent=0
    #allocation3 [shape = 'u8[262144]{0}', space=vmem, size = 0x40000, scoped, tag = 'input window, operand 1, single buffered']
    #allocation4 [shape = 's32[1]{0}', space=sflag, size = 0x4, scoped, tag = 'scoped memory for lstm_forward.1']
    #allocation5 [shape = 'u8[262144]{0}', space=vmem, size = 0x40000, scoped, tag = 'input window, operand 2, single buffered']
    #allocation6 [shape = 's32[1]{0}', space=sflag, size = 0x4, scoped, tag = 'scoped memory for lstm_forward.1']
    #allocation7 [shape = 'u8[65536]{0}', space=vmem, size = 0x10000, scoped, tag = 'input window, operand 4, single buffered']
    %11 = vsyncpa [#allocation4], 0
    %12 = vsyncpa [#allocation6], 0
    // Predicated region
    $region2: #{lstm_forward.1} parent=1 // pred_check
      _
    $region3: #{lstm_forward.1} parent=1 // pred_check_branch
      %14 = sbr.rel (0) target = $region5
    $region4: #{lstm_forward.1} parent=1 // pred_region
      _
    $region5: #{lstm_forward.1} parent=1 // pred_fallthru
      _
    // Predicated region
    $region6: #{lstm_forward.1} parent=1 // pred_check
      _
    $region7: #{lstm_forward.1} parent=1 // pred_check_branch
      %16 = sbr.rel (0) target = $region9
    $region8: #{lstm_forward.1} parent=1 // pred_region
      %s18 = ssub.s32 8192, 8192
      %19 = vsyncadd [#allocation4], %s18
      %s20 = sshll.u32 [#allocation3], 4
      %s21 = int_to_ptr.vmem [resolvable:$true] %s20
      %26 = dma.hbm_to_vmem [thread:$0]  %s1, 8192, %s21, [#allocation4], 512, 512, 32
    $region9: #{lstm_forward.1} parent=1 // pred_fallthru
      _
    // Predicated region
    $region10: #{lstm_forward.1} parent=1 // pred_check
      _
    $region11: #{lstm_forward.1} parent=1 // pred_check_branch
      %28 = sbr.rel (0) target = $region13
    $region12: #{lstm_forward.1} parent=1 // pred_region
      %s30 = ssub.s32 8192, 8192
      %31 = vsyncadd [#allocation6], %s30
      %s32 = sshll.u32 [#allocation5], 4
      %s33 = int_to_ptr.vmem [resolvable:$true] %s32
      %38 = dma.hbm_to_vmem [thread:$0]  %s2, 8192, %s33, [#allocation6], 512, 512, 32
    $region13: #{lstm_forward.1} parent=1 // pred_fallthru
      _
    // Predicated region
    $region14: #{lstm_forward.1} parent=1 // pred_check
      _
    $region15: #{lstm_forward.1} parent=1 // pred_check_branch
      %40 = sbr.rel (0) target = $region17
    $region16: #{lstm_forward.1} parent=1 // pred_region
      _
    $region17: #{lstm_forward.1} parent=1 // pred_fallthru
      _
    // Predicated region
    $region18: #{lstm_forward.1} parent=1 // pred_check
      _
    $region19: #{lstm_forward.1} parent=1 // pred_check_branch
      %42 = sbr.rel (0) target = $region21
    $region20: #{lstm_forward.1} parent=1 // pred_region
      %s44 = ssub.s32 2048, 2048
      %45 = vsyncadd [#allocation6], %s44
      %s46 = sshll.u32 [#allocation7], 4
      %s47 = int_to_ptr.vmem [resolvable:$true] %s46
      %52 = dma.hbm_to_vmem [thread:$0]  %s4, 2048, %s47, [#allocation6], 128, 128, 8
    $region21: #{lstm_forward.1} parent=1 // pred_fallthru
      _
    // Predicated region
    $region22: #{lstm_forward.1} parent=1 // pred_check
      _
    $region23: #{lstm_forward.1} parent=1 // pred_check_branch
      %54 = sbr.rel (0) target = $region25
    $region24: #{lstm_forward.1} parent=1 // pred_region
      _
    $region25: #{lstm_forward.1} parent=1 // pred_fallthru
      _
    // Predicated region
    $region26: #{lstm_forward.1} parent=1 // pred_check
      _
    $region27: #{lstm_forward.1} parent=1 // pred_check_branch
      %56 = sbr.rel (0) target = $region29
    $region28: #{lstm_forward.1} parent=1 // pred_region
      %57 = dma.done [#allocation4], 8192
    $region29: #{lstm_forward.1} parent=1 // pred_fallthru
      _
    // Predicated region
    $region30: #{lstm_forward.1} parent=1 // pred_check
      _
    $region31: #{lstm_forward.1} parent=1 // pred_check_branch
      %59 = sbr.rel (0) target = $region33
    $region32: #{lstm_forward.1} parent=1 // pred_region
      %60 = dma.done [#allocation6], 8192
    $region33: #{lstm_forward.1} parent=1 // pred_fallthru
      _
    // Predicated region
    $region34: #{lstm_forward.1} parent=1 // pred_check
      _
    $region35: #{lstm_forward.1} parent=1 // pred_check_branch
      %62 = sbr.rel (0) target = $region37
    $region36: #{lstm_forward.1} parent=1 // pred_region
      %63 = dma.done [#allocation6], 2048
    $region37: #{lstm_forward.1} parent=1 // pred_fallthru
      _
    %v64 = vld [vmem:[%s0] sm:$0xff]
    %v65 = vld [vmem:[%s0 + $0x8] sm:$0xff]
    %v66 = vld [vmem:[%s0 + $0x10] sm:$0xff]
    %v67 = vld [vmem:[%s0 + $0x18] sm:$0xff]
    %v68 = vld [vmem:[%s0 + $0x20] sm:$0xff]
    %v69 = vld [vmem:[%s0 + $0x28] sm:$0xff]
    %v70 = vld [vmem:[%s0 + $0x30] sm:$0xff]
    %v71 = vld [vmem:[%s0 + $0x38] sm:$0xff]
    %v72 = vld [vmem:[#allocation3] sm:$0xff]
    %v73 = vld [vmem:[#allocation3 + $0x8] sm:$0xff]
    %v74 = vld [vmem:[#allocation3 + $0x10] sm:$0xff]
    %v75 = vld [vmem:[#allocation3 + $0x18] sm:$0xff]
    %v76 = vld [vmem:[#allocation3 + $0x20] sm:$0xff]
    %v77 = vld [vmem:[#allocation3 + $0x28] sm:$0xff]
    %v78 = vld [vmem:[#allocation3 + $0x30] sm:$0xff]
    %v79 = vld [vmem:[#allocation3 + $0x38] sm:$0xff]
    %v80 = vld [vmem:[#allocation3 + $0x40] sm:$0xff]
    %v81 = vld [vmem:[#allocation3 + $0x48] sm:$0xff]
    %v82 = vld [vmem:[#allocation3 + $0x50] sm:$0xff]
    %v83 = vld [vmem:[#allocation3 + $0x58] sm:$0xff]
    %v84 = vld [vmem:[#allocation3 + $0x60] sm:$0xff]
    %v85 = vld [vmem:[#allocation3 + $0x68] sm:$0xff]
    %v86 = vld [vmem:[#allocation3 + $0x70] sm:$0xff]
    %v87 = vld [vmem:[#allocation3 + $0x78] sm:$0xff]
    %v88 = vld [vmem:[#allocation3 + $0x80] sm:$0xff]
    %v89 = vld [vmem:[#allocation3 + $0x88] sm:$0xff]
    %v90 = vld [vmem:[#allocation3 + $0x90] sm:$0xff]
    %v91 = vld [vmem:[#allocation3 + $0x98] sm:$0xff]
    %v92 = vld [vmem:[#allocation3 + $0xa0] sm:$0xff]
    %v93 = vld [vmem:[#allocation3 + $0xa8] sm:$0xff]
    %v94 = vld [vmem:[#allocation3 + $0xb0] sm:$0xff]
    %v95 = vld [vmem:[#allocation3 + $0xb8] sm:$0xff]
    %v96 = vld [vmem:[#allocation3 + $0xc0] sm:$0xff]
    %v97 = vld [vmem:[#allocation3 + $0xc8] sm:$0xff]
    %v98 = vld [vmem:[#allocation3 + $0xd0] sm:$0xff]
    %v99 = vld [vmem:[#allocation3 + $0xd8] sm:$0xff]
    %v100 = vld [vmem:[#allocation3 + $0xe0] sm:$0xff]
    %v101 = vld [vmem:[#allocation3 + $0xe8] sm:$0xff]
    %v102 = vld [vmem:[#allocation3 + $0xf0] sm:$0xff]
    %v103 = vld [vmem:[#allocation3 + $0xf8] sm:$0xff]
    %v104 = vld [vmem:[#allocation3 + $0x100] sm:$0xff]
    %v105 = vld [vmem:[#allocation3 + $0x108] sm:$0xff]
    %v106 = vld [vmem:[#allocation3 + $0x110] sm:$0xff]
    %v107 = vld [vmem:[#allocation3 + $0x118] sm:$0xff]
    %v108 = vld [vmem:[#allocation3 + $0x120] sm:$0xff]
    %v109 = vld [vmem:[#allocation3 + $0x128] sm:$0xff]
    %v110 = vld [vmem:[#allocation3 + $0x130] sm:$0xff]
    %v111 = vld [vmem:[#allocation3 + $0x138] sm:$0xff]
    %v112 = vld [vmem:[#allocation3 + $0x140] sm:$0xff]
    %v113 = vld [vmem:[#allocation3 + $0x148] sm:$0xff]
    %v114 = vld [vmem:[#allocation3 + $0x150] sm:$0xff]
    %v115 = vld [vmem:[#allocation3 + $0x158] sm:$0xff]
    %v116 = vld [vmem:[#allocation3 + $0x160] sm:$0xff]
    %v117 = vld [vmem:[#allocation3 + $0x168] sm:$0xff]
    %v118 = vld [vmem:[#allocation3 + $0x170] sm:$0xff]
    %v119 = vld [vmem:[#allocation3 + $0x178] sm:$0xff]
    %v120 = vld [vmem:[#allocation3 + $0x180] sm:$0xff]
    %v121 = vld [vmem:[#allocation3 + $0x188] sm:$0xff]
    %v122 = vld [vmem:[#allocation3 + $0x190] sm:$0xff]
    %v123 = vld [vmem:[#allocation3 + $0x198] sm:$0xff]
    %v124 = vld [vmem:[#allocation3 + $0x1a0] sm:$0xff]
    %v125 = vld [vmem:[#allocation3 + $0x1a8] sm:$0xff]
    %v126 = vld [vmem:[#allocation3 + $0x1b0] sm:$0xff]
    %v127 = vld [vmem:[#allocation3 + $0x1b8] sm:$0xff]
    %v128 = vld [vmem:[#allocation3 + $0x1c0] sm:$0xff]
    %v129 = vld [vmem:[#allocation3 + $0x1c8] sm:$0xff]
    %v130 = vld [vmem:[#allocation3 + $0x1d0] sm:$0xff]
    %v131 = vld [vmem:[#allocation3 + $0x1d8] sm:$0xff]
    %v132 = vld [vmem:[#allocation3 + $0x1e0] sm:$0xff]
    %v133 = vld [vmem:[#allocation3 + $0x1e8] sm:$0xff]
    %v134 = vld [vmem:[#allocation3 + $0x1f0] sm:$0xff]
    %v135 = vld [vmem:[#allocation3 + $0x1f8] sm:$0xff]
    %v136 = vld [vmem:[%s3] sm:$0xf]
    %v138 = vlaneseq
    %v139 = vshrl.u32 %v138, 7
    %v140 = vsub.s32 0, %v139
    %v141 = vrot.slane %v136, %v140
    %v142 = vlaneseq
    %v143 = vshrl.u32 %v142, 7
    %v144 = vsub.s32 1, %v143
    %v145 = vrot.slane %v136, %v144
    %v146 = vlaneseq
    %v147 = vshrl.u32 %v146, 7
    %v148 = vsub.s32 2, %v147
    %v149 = vrot.slane %v136, %v148
    %v150 = vlaneseq
    %v151 = vshrl.u32 %v150, 7
    %v152 = vsub.s32 3, %v151
    %v153 = vrot.slane %v136, %v152
    %158 = vmatprep.subr.mxu0 %v133
    %159 = vmatpush1.msra.mxu0 %v132
    %160 = vmatprep.subr.mxu0 %v129
    %161 = vmatpush1.msra.mxu0 %v128
    %162 = vmatprep.subr.mxu0 %v125
    %163 = vmatpush1.msra.mxu0 %v124
    %164 = vmatprep.subr.mxu0 %v121
    %165 = vmatpush1.msra.mxu0 %v120
    %166 = vmatprep.subr.mxu0 %v117
    %167 = vmatpush1.msra.mxu0 %v116
    %168 = vmatprep.subr.mxu0 %v113
    %169 = vmatpush1.msra.mxu0 %v112
    %170 = vmatprep.subr.mxu0 %v109
    %171 = vmatpush1.msra.mxu0 %v108
    %172 = vmatprep.subr.mxu0 %v105
    %173 = vmatpush1.msra.mxu0 %v104
    %174 = vmatprep.subr.mxu0 %v101
    %175 = vmatpush1.msra.mxu0 %v100
    %176 = vmatprep.subr.mxu0 %v97
    %177 = vmatpush1.msra.mxu0 %v96
    %178 = vmatprep.subr.mxu0 %v93
    %179 = vmatpush1.msra.mxu0 %v92
    %180 = vmatprep.subr.mxu0 %v89
    %181 = vmatpush1.msra.mxu0 %v88
    %182 = vmatprep.subr.mxu0 %v85
    %183 = vmatpush1.msra.mxu0 %v84
    %184 = vmatprep.subr.mxu0 %v81
    %185 = vmatpush1.msra.mxu0 %v80
    %186 = vmatprep.subr.mxu0 %v77
    %187 = vmatpush1.msra.mxu0 %v76
    %188 = vmatprep.subr.mxu0 %v73
    %189 = vmatpush1.msra.mxu0 %v72
    %190 = vmatprep.subr.mxu0 0.0
    %191 = vmatpush2.msra.mxu0 0.0
    %192 = vmatprep.subr.mxu0 0.0
    %193 = vmatpush2.msra.mxu0 0.0
    %194 = vmatprep.subr.mxu0 0.0
    %195 = vmatpush2.msra.mxu0 0.0
    %196 = vmatprep.subr.mxu0 0.0
    %197 = vmatpush2.msra.mxu0 0.0
    %198 = vmatprep.subr.mxu0 0.0
    %199 = vmatpush2.msra.mxu0 0.0
    %200 = vmatprep.subr.mxu0 0.0
    %201 = vmatpush2.msra.mxu0 0.0
    %202 = vmatprep.subr.mxu0 0.0
    %203 = vmatpush2.msra.mxu0 0.0
    %204 = vmatprep.subr.mxu0 0.0
    %205 = vmatpush2.msra.mxu0 0.0
    %206 = vmatprep.subr.mxu0 0.0
    %207 = vmatpush2.msra.mxu0 0.0
    %208 = vmatprep.subr.mxu0 0.0
    %209 = vmatpush2.msra.mxu0 0.0
    %210 = vmatprep.subr.mxu0 0.0
    %211 = vmatpush2.msra.mxu0 0.0
    %212 = vmatprep.subr.mxu0 0.0
    %213 = vmatpush2.msra.mxu0 0.0
    %214 = vmatprep.subr.mxu0 0.0
    %215 = vmatpush2.msra.mxu0 0.0
    %216 = vmatprep.subr.mxu0 0.0
    %217 = vmatpush2.msra.mxu0 0.0
    %218 = vmatprep.subr.mxu0 0.0
    %219 = vmatpush2.msra.mxu0 0.0
    %220 = vmatprep.subr.mxu0 0.0
    %221 = vmatpush2.msra.mxu0 0.0
    %222 = vmatprep.mubr.f32.mxu0 0.0
    %223 = vmatmul.mubr.f32.gmra.mxu0 %v64
    %v224 = vpop.f32.mrf.mxu0
    %v225 = vadd.f32 %v141, %v224
    %v226 = vpop.f32.mrf.mxu0
    %v227 = vadd.f32 %v145, %v226
    %228 = vmatprep.mubr.f32.mxu0 0.0
    %229 = vmatmul.mubr.f32.gmra.mxu0 %v65
    %v230 = vpop.f32.mrf.mxu0
    %v231 = vadd.f32 %v141, %v230
    %v232 = vpop.f32.mrf.mxu0
    %v233 = vadd.f32 %v145, %v232
    %234 = vmatprep.mubr.f32.mxu0 0.0
    %235 = vmatmul.mubr.f32.gmra.mxu0 %v66
    %v236 = vpop.f32.mrf.mxu0
    %v237 = vadd.f32 %v141, %v236
    %v238 = vpop.f32.mrf.mxu0
    %v239 = vadd.f32 %v145, %v238
    %240 = vmatprep.mubr.f32.mxu0 0.0
    %241 = vmatmul.mubr.f32.gmra.mxu0 %v67
    %v242 = vpop.f32.mrf.mxu0
    %v243 = vadd.f32 %v141, %v242
    %v244 = vpop.f32.mrf.mxu0
    %v245 = vadd.f32 %v145, %v244
    %246 = vmatprep.mubr.f32.mxu0 0.0
    %247 = vmatmul.mubr.f32.gmra.mxu0 %v68
    %v248 = vpop.f32.mrf.mxu0
    %v249 = vadd.f32 %v141, %v248
    %v250 = vpop.f32.mrf.mxu0
    %v251 = vadd.f32 %v145, %v250
    %252 = vmatprep.mubr.f32.mxu0 0.0
    %253 = vmatmul.mubr.f32.gmra.mxu0 %v69
    %v254 = vpop.f32.mrf.mxu0
    %v255 = vadd.f32 %v141, %v254
    %v256 = vpop.f32.mrf.mxu0
    %v257 = vadd.f32 %v145, %v256
    %258 = vmatprep.mubr.f32.mxu0 0.0
    %259 = vmatmul.mubr.f32.gmra.mxu0 %v70
    %v260 = vpop.f32.mrf.mxu0
    %v261 = vadd.f32 %v141, %v260
    %v262 = vpop.f32.mrf.mxu0
    %v263 = vadd.f32 %v145, %v262
    %264 = vmatprep.mubr.f32.mxu0 0.0
    %265 = vmatmul.mubr.f32.gmra.mxu0 %v71
    %v266 = vpop.f32.mrf.mxu0
    %v267 = vadd.f32 %v141, %v266
    %v268 = vpop.f32.mrf.mxu0
    %v269 = vadd.f32 %v145, %v268
    %270 = vdwg.mxu0
    %271 = vmatprep.subr.mxu0 %v135
    %272 = vmatpush1.msra.mxu0 %v134
    %273 = vmatprep.subr.mxu0 %v131
    %274 = vmatpush1.msra.mxu0 %v130
    %275 = vmatprep.subr.mxu0 %v127
    %276 = vmatpush1.msra.mxu0 %v126
    %277 = vmatprep.subr.mxu0 %v123
    %278 = vmatpush1.msra.mxu0 %v122
    %279 = vmatprep.subr.mxu0 %v119
    %280 = vmatpush1.msra.mxu0 %v118
    %281 = vmatprep.subr.mxu0 %v115
    %282 = vmatpush1.msra.mxu0 %v114
    %283 = vmatprep.subr.mxu0 %v111
    %284 = vmatpush1.msra.mxu0 %v110
    %285 = vmatprep.subr.mxu0 %v107
    %286 = vmatpush1.msra.mxu0 %v106
    %287 = vmatprep.subr.mxu0 %v103
    %288 = vmatpush1.msra.mxu0 %v102
    %289 = vmatprep.subr.mxu0 %v99
    %290 = vmatpush1.msra.mxu0 %v98
    %291 = vmatprep.subr.mxu0 %v95
    %292 = vmatpush1.msra.mxu0 %v94
    %293 = vmatprep.subr.mxu0 %v91
    %294 = vmatpush1.msra.mxu0 %v90
    %295 = vmatprep.subr.mxu0 %v87
    %296 = vmatpush1.msra.mxu0 %v86
    %297 = vmatprep.subr.mxu0 %v83
    %298 = vmatpush1.msra.mxu0 %v82
    %299 = vmatprep.subr.mxu0 %v79
    %300 = vmatpush1.msra.mxu0 %v78
    %301 = vmatprep.subr.mxu0 %v75
    %302 = vmatpush1.msra.mxu0 %v74
    %303 = vmatprep.subr.mxu0 0.0
    %304 = vmatpush2.msra.mxu0 0.0
    %305 = vmatprep.subr.mxu0 0.0
    %306 = vmatpush2.msra.mxu0 0.0
    %307 = vmatprep.subr.mxu0 0.0
    %308 = vmatpush2.msra.mxu0 0.0
    %309 = vmatprep.subr.mxu0 0.0
    %310 = vmatpush2.msra.mxu0 0.0
    %311 = vmatprep.subr.mxu0 0.0
    %312 = vmatpush2.msra.mxu0 0.0
    %313 = vmatprep.subr.mxu0 0.0
    %314 = vmatpush2.msra.mxu0 0.0
    %315 = vmatprep.subr.mxu0 0.0
    %316 = vmatpush2.msra.mxu0 0.0
    %317 = vmatprep.subr.mxu0 0.0
    %318 = vmatpush2.msra.mxu0 0.0
    %319 = vmatprep.subr.mxu0 0.0
    %320 = vmatpush2.msra.mxu0 0.0
    %321 = vmatprep.subr.mxu0 0.0
    %322 = vmatpush2.msra.mxu0 0.0
    %323 = vmatprep.subr.mxu0 0.0
    %324 = vmatpush2.msra.mxu0 0.0
    %325 = vmatprep.subr.mxu0 0.0
    %326 = vmatpush2.msra.mxu0 0.0
    %327 = vmatprep.subr.mxu0 0.0
    %328 = vmatpush2.msra.mxu0 0.0
    %329 = vmatprep.subr.mxu0 0.0
    %330 = vmatpush2.msra.mxu0 0.0
    %331 = vmatprep.subr.mxu0 0.0
    %332 = vmatpush2.msra.mxu0 0.0
    %333 = vmatprep.subr.mxu0 0.0
    %334 = vmatpush2.msra.mxu0 0.0
    %335 = vmatprep.mubr.f32.mxu0 0.0
    %336 = vmatmul.mubr.f32.gmra.mxu0 %v64
    %v337 = vpop.f32.mrf.mxu0
    %v338 = vadd.f32 %v149, %v337
    %v339 = vpop.f32.mrf.mxu0
    %v340 = vadd.f32 %v153, %v339
    %341 = vmatprep.mubr.f32.mxu0 0.0
    %342 = vmatmul.mubr.f32.gmra.mxu0 %v65
    %v343 = vpop.f32.mrf.mxu0
    %v344 = vadd.f32 %v149, %v343
    %v345 = vpop.f32.mrf.mxu0
    %v346 = vadd.f32 %v153, %v345
    %347 = vmatprep.mubr.f32.mxu0 0.0
    %348 = vmatmul.mubr.f32.gmra.mxu0 %v66
    %v349 = vpop.f32.mrf.mxu0
    %v350 = vadd.f32 %v149, %v349
    %v351 = vpop.f32.mrf.mxu0
    %v352 = vadd.f32 %v153, %v351
    %353 = vmatprep.mubr.f32.mxu0 0.0
    %354 = vmatmul.mubr.f32.gmra.mxu0 %v67
    %v355 = vpop.f32.mrf.mxu0
    %v356 = vadd.f32 %v149, %v355
    %v357 = vpop.f32.mrf.mxu0
    %v358 = vadd.f32 %v153, %v357
    %359 = vmatprep.mubr.f32.mxu0 0.0
    %360 = vmatmul.mubr.f32.gmra.mxu0 %v68
    %v361 = vpop.f32.mrf.mxu0
    %v362 = vadd.f32 %v149, %v361
    %v363 = vpop.f32.mrf.mxu0
    %v364 = vadd.f32 %v153, %v363
    %365 = vmatprep.mubr.f32.mxu0 0.0
    %366 = vmatmul.mubr.f32.gmra.mxu0 %v69
    %v367 = vpop.f32.mrf.mxu0
    %v368 = vadd.f32 %v149, %v367
    %v369 = vpop.f32.mrf.mxu0
    %v370 = vadd.f32 %v153, %v369
    %371 = vmatprep.mubr.f32.mxu0 0.0
    %372 = vmatmul.mubr.f32.gmra.mxu0 %v70
    %v373 = vpop.f32.mrf.mxu0
    %v374 = vadd.f32 %v149, %v373
    %v375 = vpop.f32.mrf.mxu0
    %v376 = vadd.f32 %v153, %v375
    %377 = vmatprep.mubr.f32.mxu0 0.0
    %378 = vmatmul.mubr.f32.gmra.mxu0 %v71
    %v379 = vpop.f32.mrf.mxu0
    %v380 = vadd.f32 %v149, %v379
    %v381 = vpop.f32.mrf.mxu0
    %v382 = vadd.f32 %v153, %v381
    %383 = vdwg.mxu0
    %384 = vst [vmem:[#allocation2] sm:$0xff] %v225
    %385 = vst [vmem:[#allocation2 + $0x8] sm:$0xff] %v227
    %386 = vst [vmem:[#allocation2 + $0x10] sm:$0xff] %v338
    %387 = vst [vmem:[#allocation2 + $0x18] sm:$0xff] %v340
    %388 = vst [vmem:[#allocation2 + $0x20] sm:$0xff] %v231
    %389 = vst [vmem:[#allocation2 + $0x28] sm:$0xff] %v233
    %390 = vst [vmem:[#allocation2 + $0x30] sm:$0xff] %v344
    %391 = vst [vmem:[#allocation2 + $0x38] sm:$0xff] %v346
    %392 = vst [vmem:[#allocation2 + $0x40] sm:$0xff] %v237
    %393 = vst [vmem:[#allocation2 + $0x48] sm:$0xff] %v239
    %394 = vst [vmem:[#allocation2 + $0x50] sm:$0xff] %v350
    %395 = vst [vmem:[#allocation2 + $0x58] sm:$0xff] %v352
    %396 = vst [vmem:[#allocation2 + $0x60] sm:$0xff] %v243
    %397 = vst [vmem:[#allocation2 + $0x68] sm:$0xff] %v245
    %398 = vst [vmem:[#allocation2 + $0x70] sm:$0xff] %v356
    %399 = vst [vmem:[#allocation2 + $0x78] sm:$0xff] %v358
    %400 = vst [vmem:[#allocation2 + $0x80] sm:$0xff] %v249
    %401 = vst [vmem:[#allocation2 + $0x88] sm:$0xff] %v251
    %402 = vst [vmem:[#allocation2 + $0x90] sm:$0xff] %v362
    %403 = vst [vmem:[#allocation2 + $0x98] sm:$0xff] %v364
    %404 = vst [vmem:[#allocation2 + $0xa0] sm:$0xff] %v255
    %405 = vst [vmem:[#allocation2 + $0xa8] sm:$0xff] %v257
    %406 = vst [vmem:[#allocation2 + $0xb0] sm:$0xff] %v368
    %407 = vst [vmem:[#allocation2 + $0xb8] sm:$0xff] %v370
    %408 = vst [vmem:[#allocation2 + $0xc0] sm:$0xff] %v261
    %409 = vst [vmem:[#allocation2 + $0xc8] sm:$0xff] %v263
    %410 = vst [vmem:[#allocation2 + $0xd0] sm:$0xff] %v374
    %411 = vst [vmem:[#allocation2 + $0xd8] sm:$0xff] %v376
    %412 = vst [vmem:[#allocation2 + $0xe0] sm:$0xff] %v267
    %413 = vst [vmem:[#allocation2 + $0xe8] sm:$0xff] %v269
    %414 = vst [vmem:[#allocation2 + $0xf0] sm:$0xff] %v380
    %415 = vst [vmem:[#allocation2 + $0xf8] sm:$0xff] %v382
    %v416 = vld [vmem:[#allocation2] sm:$0xff]
    %v417 = vld [vmem:[#allocation2 + $0x8] sm:$0xff]
    %v418 = vld [vmem:[#allocation2 + $0x10] sm:$0xff]
    %v419 = vld [vmem:[#allocation2 + $0x18] sm:$0xff]
    %v420 = vld [vmem:[#allocation5] sm:$0xff]
    %v421 = vld [vmem:[#allocation5 + $0x8] sm:$0xff]
    %v422 = vld [vmem:[#allocation5 + $0x10] sm:$0xff]
    %v423 = vld [vmem:[#allocation5 + $0x18] sm:$0xff]
    %v424 = vld [vmem:[#allocation5 + $0x20] sm:$0xff]
    %v425 = vld [vmem:[#allocation5 + $0x28] sm:$0xff]
    %v426 = vld [vmem:[#allocation5 + $0x30] sm:$0xff]
    %v427 = vld [vmem:[#allocation5 + $0x38] sm:$0xff]
    %v428 = vld [vmem:[#allocation5 + $0x40] sm:$0xff]
    %v429 = vld [vmem:[#allocation5 + $0x48] sm:$0xff]
    %v430 = vld [vmem:[#allocation5 + $0x50] sm:$0xff]
    %v431 = vld [vmem:[#allocation5 + $0x58] sm:$0xff]
    %v432 = vld [vmem:[#allocation5 + $0x60] sm:$0xff]
    %v433 = vld [vmem:[#allocation5 + $0x68] sm:$0xff]
    %v434 = vld [vmem:[#allocation5 + $0x70] sm:$0xff]
    %v435 = vld [vmem:[#allocation5 + $0x78] sm:$0xff]
    %v436 = vld [vmem:[#allocation5 + $0x80] sm:$0xff]
    %v437 = vld [vmem:[#allocation5 + $0x88] sm:$0xff]
    %v438 = vld [vmem:[#allocation5 + $0x90] sm:$0xff]
    %v439 = vld [vmem:[#allocation5 + $0x98] sm:$0xff]
    %v440 = vld [vmem:[#allocation5 + $0xa0] sm:$0xff]
    %v441 = vld [vmem:[#allocation5 + $0xa8] sm:$0xff]
    %v442 = vld [vmem:[#allocation5 + $0xb0] sm:$0xff]
    %v443 = vld [vmem:[#allocation5 + $0xb8] sm:$0xff]
    %v444 = vld [vmem:[#allocation5 + $0xc0] sm:$0xff]
    %v445 = vld [vmem:[#allocation5 + $0xc8] sm:$0xff]
    %v446 = vld [vmem:[#allocation5 + $0xd0] sm:$0xff]
    %v447 = vld [vmem:[#allocation5 + $0xd8] sm:$0xff]
    %v448 = vld [vmem:[#allocation5 + $0xe0] sm:$0xff]
    %v449 = vld [vmem:[#allocation5 + $0xe8] sm:$0xff]
    %v450 = vld [vmem:[#allocation5 + $0xf0] sm:$0xff]
    %v451 = vld [vmem:[#allocation5 + $0xf8] sm:$0xff]
    %v452 = vld [vmem:[#allocation5 + $0x100] sm:$0xff]
    %v453 = vld [vmem:[#allocation5 + $0x108] sm:$0xff]
    %v454 = vld [vmem:[#allocation5 + $0x110] sm:$0xff]
    %v455 = vld [vmem:[#allocation5 + $0x118] sm:$0xff]
    %v456 = vld [vmem:[#allocation5 + $0x120] sm:$0xff]
    %v457 = vld [vmem:[#allocation5 + $0x128] sm:$0xff]
    %v458 = vld [vmem:[#allocation5 + $0x130] sm:$0xff]
    %v459 = vld [vmem:[#allocation5 + $0x138] sm:$0xff]
    %v460 = vld [vmem:[#allocation5 + $0x140] sm:$0xff]
    %v461 = vld [vmem:[#allocation5 + $0x148] sm:$0xff]
    %v462 = vld [vmem:[#allocation5 + $0x150] sm:$0xff]
    %v463 = vld [vmem:[#allocation5 + $0x158] sm:$0xff]
    %v464 = vld [vmem:[#allocation5 + $0x160] sm:$0xff]
    %v465 = vld [vmem:[#allocation5 + $0x168] sm:$0xff]
    %v466 = vld [vmem:[#allocation5 + $0x170] sm:$0xff]
    %v467 = vld [vmem:[#allocation5 + $0x178] sm:$0xff]
    %v468 = vld [vmem:[#allocation5 + $0x180] sm:$0xff]
    %v469 = vld [vmem:[#allocation5 + $0x188] sm:$0xff]
    %v470 = vld [vmem:[#allocation5 + $0x190] sm:$0xff]
    %v471 = vld [vmem:[#allocation5 + $0x198] sm:$0xff]
    %v472 = vld [vmem:[#allocation5 + $0x1a0] sm:$0xff]
    %v473 = vld [vmem:[#allocation5 + $0x1a8] sm:$0xff]
    %v474 = vld [vmem:[#allocation5 + $0x1b0] sm:$0xff]
    %v475 = vld [vmem:[#allocation5 + $0x1b8] sm:$0xff]
    %v476 = vld [vmem:[#allocation5 + $0x1c0] sm:$0xff]
    %v477 = vld [vmem:[#allocation5 + $0x1c8] sm:$0xff]
    %v478 = vld [vmem:[#allocation5 + $0x1d0] sm:$0xff]
    %v479 = vld [vmem:[#allocation5 + $0x1d8] sm:$0xff]
    %v480 = vld [vmem:[#allocation5 + $0x1e0] sm:$0xff]
    %v481 = vld [vmem:[#allocation5 + $0x1e8] sm:$0xff]
    %v482 = vld [vmem:[#allocation5 + $0x1f0] sm:$0xff]
    %v483 = vld [vmem:[#allocation5 + $0x1f8] sm:$0xff]
    %484 = vmatprep.subr.mxu0 %v481
    %485 = vmatpush1.msra.mxu0 %v480
    %486 = vmatprep.subr.mxu0 %v477
    %487 = vmatpush1.msra.mxu0 %v476
    %488 = vmatprep.subr.mxu0 %v473
    %489 = vmatpush1.msra.mxu0 %v472
    %490 = vmatprep.subr.mxu0 %v469
    %491 = vmatpush1.msra.mxu0 %v468
    %492 = vmatprep.subr.mxu0 %v465
    %493 = vmatpush1.msra.mxu0 %v464
    %494 = vmatprep.subr.mxu0 %v461
    %495 = vmatpush1.msra.mxu0 %v460
    %496 = vmatprep.subr.mxu0 %v457
    %497 = vmatpush1.msra.mxu0 %v456
    %498 = vmatprep.subr.mxu0 %v453
    %499 = vmatpush1.msra.mxu0 %v452
    %500 = vmatprep.subr.mxu0 %v449
    %501 = vmatpush1.msra.mxu0 %v448
    %502 = vmatprep.subr.mxu0 %v445
    %503 = vmatpush1.msra.mxu0 %v444
    %504 = vmatprep.subr.mxu0 %v441
    %505 = vmatpush1.msra.mxu0 %v440
    %506 = vmatprep.subr.mxu0 %v437
    %507 = vmatpush1.msra.mxu0 %v436
    %508 = vmatprep.subr.mxu0 %v433
    %509 = vmatpush1.msra.mxu0 %v432
    %510 = vmatprep.subr.mxu0 %v429
    %511 = vmatpush1.msra.mxu0 %v428
    %512 = vmatprep.subr.mxu0 %v425
    %513 = vmatpush1.msra.mxu0 %v424
    %514 = vmatprep.subr.mxu0 %v421
    %515 = vmatpush1.msra.mxu0 %v420
    %516 = vmatprep.subr.mxu0 0.0
    %517 = vmatpush2.msra.mxu0 0.0
    %518 = vmatprep.subr.mxu0 0.0
    %519 = vmatpush2.msra.mxu0 0.0
    %520 = vmatprep.subr.mxu0 0.0
    %521 = vmatpush2.msra.mxu0 0.0
    %522 = vmatprep.subr.mxu0 0.0
    %523 = vmatpush2.msra.mxu0 0.0
    %524 = vmatprep.subr.mxu0 0.0
    %525 = vmatpush2.msra.mxu0 0.0
    %526 = vmatprep.subr.mxu0 0.0
    %527 = vmatpush2.msra.mxu0 0.0
    %528 = vmatprep.subr.mxu0 0.0
    %529 = vmatpush2.msra.mxu0 0.0
    %530 = vmatprep.subr.mxu0 0.0
    %531 = vmatpush2.msra.mxu0 0.0
    %532 = vmatprep.subr.mxu0 0.0
    %533 = vmatpush2.msra.mxu0 0.0
    %534 = vmatprep.subr.mxu0 0.0
    %535 = vmatpush2.msra.mxu0 0.0
    %536 = vmatprep.subr.mxu0 0.0
    %537 = vmatpush2.msra.mxu0 0.0
    %538 = vmatprep.subr.mxu0 0.0
    %539 = vmatpush2.msra.mxu0 0.0
    %540 = vmatprep.subr.mxu0 0.0
    %541 = vmatpush2.msra.mxu0 0.0
    %542 = vmatprep.subr.mxu0 0.0
    %543 = vmatpush2.msra.mxu0 0.0
    %544 = vmatprep.subr.mxu0 0.0
    %545 = vmatpush2.msra.mxu0 0.0
    %546 = vmatprep.subr.mxu0 0.0
    %547 = vmatpush2.msra.mxu0 0.0
    %548 = vmatprep.mubr.f32.mxu0 0.0
    %549 = vmatmul.mubr.f32.gmra.mxu0 0.0
    %v550 = vpop.f32.mrf.mxu0
    %v551 = vadd.f32 0.0, %v550
    %v552 = vpop.f32.mrf.mxu0
    %v553 = vadd.f32 0.0, %v552
    %554 = vdwg.mxu0
    %555 = vmatprep.subr.mxu0 %v483
    %556 = vmatpush1.msra.mxu0 %v482
    %557 = vmatprep.subr.mxu0 %v479
    %558 = vmatpush1.msra.mxu0 %v478
    %559 = vmatprep.subr.mxu0 %v475
    %560 = vmatpush1.msra.mxu0 %v474
    %561 = vmatprep.subr.mxu0 %v471
    %562 = vmatpush1.msra.mxu0 %v470
    %563 = vmatprep.subr.mxu0 %v467
    %564 = vmatpush1.msra.mxu0 %v466
    %565 = vmatprep.subr.mxu0 %v463
    %566 = vmatpush1.msra.mxu0 %v462
    %567 = vmatprep.subr.mxu0 %v459
    %568 = vmatpush1.msra.mxu0 %v458
    %569 = vmatprep.subr.mxu0 %v455
    %570 = vmatpush1.msra.mxu0 %v454
    %571 = vmatprep.subr.mxu0 %v451
    %572 = vmatpush1.msra.mxu0 %v450
    %573 = vmatprep.subr.mxu0 %v447
    %574 = vmatpush1.msra.mxu0 %v446
    %575 = vmatprep.subr.mxu0 %v443
    %576 = vmatpush1.msra.mxu0 %v442
    %577 = vmatprep.subr.mxu0 %v439
    %578 = vmatpush1.msra.mxu0 %v438
    %579 = vmatprep.subr.mxu0 %v435
    %580 = vmatpush1.msra.mxu0 %v434
    %581 = vmatprep.subr.mxu0 %v431
    %582 = vmatpush1.msra.mxu0 %v430
    %583 = vmatprep.subr.mxu0 %v427
    %584 = vmatpush1.msra.mxu0 %v426
    %585 = vmatprep.subr.mxu0 %v423
    %586 = vmatpush1.msra.mxu0 %v422
    %587 = vmatprep.subr.mxu0 0.0
    %588 = vmatpush2.msra.mxu0 0.0
    %589 = vmatprep.subr.mxu0 0.0
    %590 = vmatpush2.msra.mxu0 0.0
    %591 = vmatprep.subr.mxu0 0.0
    %592 = vmatpush2.msra.mxu0 0.0
    %593 = vmatprep.subr.mxu0 0.0
    %594 = vmatpush2.msra.mxu0 0.0
    %595 = vmatprep.subr.mxu0 0.0
    %596 = vmatpush2.msra.mxu0 0.0
    %597 = vmatprep.subr.mxu0 0.0
    %598 = vmatpush2.msra.mxu0 0.0
    %599 = vmatprep.subr.mxu0 0.0
    %600 = vmatpush2.msra.mxu0 0.0
    %601 = vmatprep.subr.mxu0 0.0
    %602 = vmatpush2.msra.mxu0 0.0
    %603 = vmatprep.subr.mxu0 0.0
    %604 = vmatpush2.msra.mxu0 0.0
    %605 = vmatprep.subr.mxu0 0.0
    %606 = vmatpush2.msra.mxu0 0.0
    %607 = vmatprep.subr.mxu0 0.0
    %608 = vmatpush2.msra.mxu0 0.0
    %609 = vmatprep.subr.mxu0 0.0
    %610 = vmatpush2.msra.mxu0 0.0
    %611 = vmatprep.subr.mxu0 0.0
    %612 = vmatpush2.msra.mxu0 0.0
    %613 = vmatprep.subr.mxu0 0.0
    %614 = vmatpush2.msra.mxu0 0.0
    %615 = vmatprep.subr.mxu0 0.0
    %616 = vmatpush2.msra.mxu0 0.0
    %617 = vmatprep.subr.mxu0 0.0
    %618 = vmatpush2.msra.mxu0 0.0
    %619 = vmatprep.mubr.f32.mxu0 0.0
    %620 = vmatmul.mubr.f32.gmra.mxu0 0.0
    %v621 = vpop.f32.mrf.mxu0
    %v622 = vadd.f32 0.0, %v621
    %v623 = vpop.f32.mrf.mxu0
    %v624 = vadd.f32 0.0, %v623
    %625 = vdwg.mxu0
    %v626 = vadd.f32 %v416, %v551
    %v627 = vadd.f32 %v417, %v553
    %v628 = vadd.f32 %v418, %v622
    %v629 = vadd.f32 %v419, %v624
    %v630 = vmul.f32 %v626, 0.5
    %v631 = vmul.f32 %v627, 0.5
    %v632 = vmul.f32 %v628, 0.5
    %v633 = vtanh.pop %v630
    %v634 = vtanh.pop %v631
    %v635 = vtanh.pop %v632
    %v636 = vadd.f32 %v633, 1.0
    %v637 = vadd.f32 %v634, 1.0
    %v638 = vadd.f32 %v635, 1.0
    %v639 = vmul.f32 %v636, 0.5
    %v640 = vmul.f32 %v637, 0.5
    %v641 = vmul.f32 %v638, 0.5
    %v642 = vtanh.pop %v629
    %v643 = vmul.f32 %v640, 0.0
    %v644 = vmul.f32 %v639, %v642
    %v645 = vadd.f32 %v643, %v644
    %v646 = vtanh.pop %v645
    %v647 = vmul.f32 %v641, %v646
    %v648 = vld [vmem:[#allocation2 + $0x20] sm:$0xff]
    %v649 = vld [vmem:[#allocation2 + $0x28] sm:$0xff]
    %v650 = vld [vmem:[#allocation2 + $0x30] sm:$0xff]
    %v651 = vld [vmem:[#allocation2 + $0x38] sm:$0xff]
    %652 = vmatprep.subr.mxu0 %v481
    %653 = vmatpush1.msra.mxu0 %v480
    %654 = vmatprep.subr.mxu0 %v477
    %655 = vmatpush1.msra.mxu0 %v476
    %656 = vmatprep.subr.mxu0 %v473
    %657 = vmatpush1.msra.mxu0 %v472
    %658 = vmatprep.subr.mxu0 %v469
    %659 = vmatpush1.msra.mxu0 %v468
    %660 = vmatprep.subr.mxu0 %v465
    %661 = vmatpush1.msra.mxu0 %v464
    %662 = vmatprep.subr.mxu0 %v461
    %663 = vmatpush1.msra.mxu0 %v460
    %664 = vmatprep.subr.mxu0 %v457
    %665 = vmatpush1.msra.mxu0 %v456
    %666 = vmatprep.subr.mxu0 %v453
    %667 = vmatpush1.msra.mxu0 %v452
    %668 = vmatprep.subr.mxu0 %v449
    %669 = vmatpush1.msra.mxu0 %v448
    %670 = vmatprep.subr.mxu0 %v445
    %671 = vmatpush1.msra.mxu0 %v444
    %672 = vmatprep.subr.mxu0 %v441
    %673 = vmatpush1.msra.mxu0 %v440
    %674 = vmatprep.subr.mxu0 %v437
    %675 = vmatpush1.msra.mxu0 %v436
    %676 = vmatprep.subr.mxu0 %v433
    %677 = vmatpush1.msra.mxu0 %v432
    %678 = vmatprep.subr.mxu0 %v429
    %679 = vmatpush1.msra.mxu0 %v428
    %680 = vmatprep.subr.mxu0 %v425
    %681 = vmatpush1.msra.mxu0 %v424
    %682 = vmatprep.subr.mxu0 %v421
    %683 = vmatpush1.msra.mxu0 %v420
    %684 = vmatprep.subr.mxu0 0.0
    %685 = vmatpush2.msra.mxu0 0.0
    %686 = vmatprep.subr.mxu0 0.0
    %687 = vmatpush2.msra.mxu0 0.0
    %688 = vmatprep.subr.mxu0 0.0
    %689 = vmatpush2.msra.mxu0 0.0
    %690 = vmatprep.subr.mxu0 0.0
    %691 = vmatpush2.msra.mxu0 0.0
    %692 = vmatprep.subr.mxu0 0.0
    %693 = vmatpush2.msra.mxu0 0.0
    %694 = vmatprep.subr.mxu0 0.0
    %695 = vmatpush2.msra.mxu0 0.0
    %696 = vmatprep.subr.mxu0 0.0
    %697 = vmatpush2.msra.mxu0 0.0
    %698 = vmatprep.subr.mxu0 0.0
    %699 = vmatpush2.msra.mxu0 0.0
    %700 = vmatprep.subr.mxu0 0.0
    %701 = vmatpush2.msra.mxu0 0.0
    %702 = vmatprep.subr.mxu0 0.0
    %703 = vmatpush2.msra.mxu0 0.0
    %704 = vmatprep.subr.mxu0 0.0
    %705 = vmatpush2.msra.mxu0 0.0
    %706 = vmatprep.subr.mxu0 0.0
    %707 = vmatpush2.msra.mxu0 0.0
    %708 = vmatprep.subr.mxu0 0.0
    %709 = vmatpush2.msra.mxu0 0.0
    %710 = vmatprep.subr.mxu0 0.0
    %711 = vmatpush2.msra.mxu0 0.0
    %712 = vmatprep.subr.mxu0 0.0
    %713 = vmatpush2.msra.mxu0 0.0
    %714 = vmatprep.subr.mxu0 0.0
    %715 = vmatpush2.msra.mxu0 0.0
    %716 = vmatprep.mubr.f32.mxu0 0.0
    %717 = vmatmul.mubr.f32.gmra.mxu0 %v647
    %v718 = vpop.f32.mrf.mxu0
    %v719 = vadd.f32 0.0, %v718
    %v720 = vpop.f32.mrf.mxu0
    %v721 = vadd.f32 0.0, %v720
    %722 = vdwg.mxu0
    %723 = vmatprep.subr.mxu0 %v483
    %724 = vmatpush1.msra.mxu0 %v482
    %725 = vmatprep.subr.mxu0 %v479
    %726 = vmatpush1.msra.mxu0 %v478
    %727 = vmatprep.subr.mxu0 %v475
    %728 = vmatpush1.msra.mxu0 %v474
    %729 = vmatprep.subr.mxu0 %v471
    %730 = vmatpush1.msra.mxu0 %v470
    %731 = vmatprep.subr.mxu0 %v467
    %732 = vmatpush1.msra.mxu0 %v466
    %733 = vmatprep.subr.mxu0 %v463
    %734 = vmatpush1.msra.mxu0 %v462
    %735 = vmatprep.subr.mxu0 %v459
    %736 = vmatpush1.msra.mxu0 %v458
    %737 = vmatprep.subr.mxu0 %v455
    %738 = vmatpush1.msra.mxu0 %v454
    %739 = vmatprep.subr.mxu0 %v451
    %740 = vmatpush1.msra.mxu0 %v450
    %741 = vmatprep.subr.mxu0 %v447
    %742 = vmatpush1.msra.mxu0 %v446
    %743 = vmatprep.subr.mxu0 %v443
    %744 = vmatpush1.msra.mxu0 %v442
    %745 = vmatprep.subr.mxu0 %v439
    %746 = vmatpush1.msra.mxu0 %v438
    %747 = vmatprep.subr.mxu0 %v435
    %748 = vmatpush1.msra.mxu0 %v434
    %749 = vmatprep.subr.mxu0 %v431
    %750 = vmatpush1.msra.mxu0 %v430
    %751 = vmatprep.subr.mxu0 %v427
    %752 = vmatpush1.msra.mxu0 %v426
    %753 = vmatprep.subr.mxu0 %v423
    %754 = vmatpush1.msra.mxu0 %v422
    %755 = vmatprep.subr.mxu0 0.0
    %756 = vmatpush2.msra.mxu0 0.0
    %757 = vmatprep.subr.mxu0 0.0
    %758 = vmatpush2.msra.mxu0 0.0
    %759 = vmatprep.subr.mxu0 0.0
    %760 = vmatpush2.msra.mxu0 0.0
    %761 = vmatprep.subr.mxu0 0.0
    %762 = vmatpush2.msra.mxu0 0.0
    %763 = vmatprep.subr.mxu0 0.0
    %764 = vmatpush2.msra.mxu0 0.0
    %765 = vmatprep.subr.mxu0 0.0
    %766 = vmatpush2.msra.mxu0 0.0
    %767 = vmatprep.subr.mxu0 0.0
    %768 = vmatpush2.msra.mxu0 0.0
    %769 = vmatprep.subr.mxu0 0.0
    %770 = vmatpush2.msra.mxu0 0.0
    %771 = vmatprep.subr.mxu0 0.0
    %772 = vmatpush2.msra.mxu0 0.0
    %773 = vmatprep.subr.mxu0 0.0
    %774 = vmatpush2.msra.mxu0 0.0
    %775 = vmatprep.subr.mxu0 0.0
    %776 = vmatpush2.msra.mxu0 0.0
    %777 = vmatprep.subr.mxu0 0.0
    %778 = vmatpush2.msra.mxu0 0.0
    %779 = vmatprep.subr.mxu0 0.0
    %780 = vmatpush2.msra.mxu0 0.0
    %781 = vmatprep.subr.mxu0 0.0
    %782 = vmatpush2.msra.mxu0 0.0
    %783 = vmatprep.subr.mxu0 0.0
    %784 = vmatpush2.msra.mxu0 0.0
    %785 = vmatprep.subr.mxu0 0.0
    %786 = vmatpush2.msra.mxu0 0.0
    %787 = vmatprep.mubr.f32.mxu0 0.0
    %788 = vmatmul.mubr.f32.gmra.mxu0 %v647
    %v789 = vpop.f32.mrf.mxu0
    %v790 = vadd.f32 0.0, %v789
    %v791 = vpop.f32.mrf.mxu0
    %v792 = vadd.f32 0.0, %v791
    %793 = vdwg.mxu0
    %v794 = vadd.f32 %v648, %v719
    %v795 = vadd.f32 %v649, %v721
    %v796 = vadd.f32 %v650, %v790
    %v797 = vadd.f32 %v651, %v792
    %v798 = vmul.f32 %v794, 0.5
    %v799 = vmul.f32 %v795, 0.5
    %v800 = vmul.f32 %v796, 0.5
    %v801 = vtanh.pop %v798
    %v802 = vtanh.pop %v799
    %v803 = vtanh.pop %v800
    %v804 = vadd.f32 %v801, 1.0
    %v805 = vadd.f32 %v802, 1.0
    %v806 = vadd.f32 %v803, 1.0
    %v807 = vmul.f32 %v804, 0.5
    %v808 = vmul.f32 %v805, 0.5
    %v809 = vmul.f32 %v806, 0.5
    %v810 = vtanh.pop %v797
    %v811 = vmul.f32 %v808, %v645
    %v812 = vmul.f32 %v807, %v810
    %v813 = vadd.f32 %v811, %v812
    %v814 = vtanh.pop %v813
    %v815 = vmul.f32 %v809, %v814
    %v816 = vld [vmem:[#allocation2 + $0x40] sm:$0xff]
    %v817 = vld [vmem:[#allocation2 + $0x48] sm:$0xff]
    %v818 = vld [vmem:[#allocation2 + $0x50] sm:$0xff]
    %v819 = vld [vmem:[#allocation2 + $0x58] sm:$0xff]
    %820 = vmatprep.subr.mxu0 %v481
    %821 = vmatpush1.msra.mxu0 %v480
    %822 = vmatprep.subr.mxu0 %v477
    %823 = vmatpush1.msra.mxu0 %v476
    %824 = vmatprep.subr.mxu0 %v473
    %825 = vmatpush1.msra.mxu0 %v472
    %826 = vmatprep.subr.mxu0 %v469
    %827 = vmatpush1.msra.mxu0 %v468
    %828 = vmatprep.subr.mxu0 %v465
    %829 = vmatpush1.msra.mxu0 %v464
    %830 = vmatprep.subr.mxu0 %v461
    %831 = vmatpush1.msra.mxu0 %v460
    %832 = vmatprep.subr.mxu0 %v457
    %833 = vmatpush1.msra.mxu0 %v456
    %834 = vmatprep.subr.mxu0 %v453
    %835 = vmatpush1.msra.mxu0 %v452
    %836 = vmatprep.subr.mxu0 %v449
    %837 = vmatpush1.msra.mxu0 %v448
    %838 = vmatprep.subr.mxu0 %v445
    %839 = vmatpush1.msra.mxu0 %v444
    %840 = vmatprep.subr.mxu0 %v441
    %841 = vmatpush1.msra.mxu0 %v440
    %842 = vmatprep.subr.mxu0 %v437
    %843 = vmatpush1.msra.mxu0 %v436
    %844 = vmatprep.subr.mxu0 %v433
    %845 = vmatpush1.msra.mxu0 %v432
    %846 = vmatprep.subr.mxu0 %v429
    %847 = vmatpush1.msra.mxu0 %v428
    %848 = vmatprep.subr.mxu0 %v425
    %849 = vmatpush1.msra.mxu0 %v424
    %850 = vmatprep.subr.mxu0 %v421
    %851 = vmatpush1.msra.mxu0 %v420
    %852 = vmatprep.subr.mxu0 0.0
    %853 = vmatpush2.msra.mxu0 0.0
    %854 = vmatprep.subr.mxu0 0.0
    %855 = vmatpush2.msra.mxu0 0.0
    %856 = vmatprep.subr.mxu0 0.0
    %857 = vmatpush2.msra.mxu0 0.0
    %858 = vmatprep.subr.mxu0 0.0
    %859 = vmatpush2.msra.mxu0 0.0
    %860 = vmatprep.subr.mxu0 0.0
    %861 = vmatpush2.msra.mxu0 0.0
    %862 = vmatprep.subr.mxu0 0.0
    %863 = vmatpush2.msra.mxu0 0.0
    %864 = vmatprep.subr.mxu0 0.0
    %865 = vmatpush2.msra.mxu0 0.0
    %866 = vmatprep.subr.mxu0 0.0
    %867 = vmatpush2.msra.mxu0 0.0
    %868 = vmatprep.subr.mxu0 0.0
    %869 = vmatpush2.msra.mxu0 0.0
    %870 = vmatprep.subr.mxu0 0.0
    %871 = vmatpush2.msra.mxu0 0.0
    %872 = vmatprep.subr.mxu0 0.0
    %873 = vmatpush2.msra.mxu0 0.0
    %874 = vmatprep.subr.mxu0 0.0
    %875 = vmatpush2.msra.mxu0 0.0
    %876 = vmatprep.subr.mxu0 0.0
    %877 = vmatpush2.msra.mxu0 0.0
    %878 = vmatprep.subr.mxu0 0.0
    %879 = vmatpush2.msra.mxu0 0.0
    %880 = vmatprep.subr.mxu0 0.0
    %881 = vmatpush2.msra.mxu0 0.0
    %882 = vmatprep.subr.mxu0 0.0
    %883 = vmatpush2.msra.mxu0 0.0
    %884 = vmatprep.mubr.f32.mxu0 0.0
    %885 = vmatmul.mubr.f32.gmra.mxu0 %v815
    %v886 = vpop.f32.mrf.mxu0
    %v887 = vadd.f32 0.0, %v886
    %v888 = vpop.f32.mrf.mxu0
    %v889 = vadd.f32 0.0, %v888
    %890 = vdwg.mxu0
    %891 = vmatprep.subr.mxu0 %v483
    %892 = vmatpush1.msra.mxu0 %v482
    %893 = vmatprep.subr.mxu0 %v479
    %894 = vmatpush1.msra.mxu0 %v478
    %895 = vmatprep.subr.mxu0 %v475
    %896 = vmatpush1.msra.mxu0 %v474
    %897 = vmatprep.subr.mxu0 %v471
    %898 = vmatpush1.msra.mxu0 %v470
    %899 = vmatprep.subr.mxu0 %v467
    %900 = vmatpush1.msra.mxu0 %v466
    %901 = vmatprep.subr.mxu0 %v463
    %902 = vmatpush1.msra.mxu0 %v462
    %903 = vmatprep.subr.mxu0 %v459
    %904 = vmatpush1.msra.mxu0 %v458
    %905 = vmatprep.subr.mxu0 %v455
    %906 = vmatpush1.msra.mxu0 %v454
    %907 = vmatprep.subr.mxu0 %v451
    %908 = vmatpush1.msra.mxu0 %v450
    %909 = vmatprep.subr.mxu0 %v447
    %910 = vmatpush1.msra.mxu0 %v446
    %911 = vmatprep.subr.mxu0 %v443
    %912 = vmatpush1.msra.mxu0 %v442
    %913 = vmatprep.subr.mxu0 %v439
    %914 = vmatpush1.msra.mxu0 %v438
    %915 = vmatprep.subr.mxu0 %v435
    %916 = vmatpush1.msra.mxu0 %v434
    %917 = vmatprep.subr.mxu0 %v431
    %918 = vmatpush1.msra.mxu0 %v430
    %919 = vmatprep.subr.mxu0 %v427
    %920 = vmatpush1.msra.mxu0 %v426
    %921 = vmatprep.subr.mxu0 %v423
    %922 = vmatpush1.msra.mxu0 %v422
    %923 = vmatprep.subr.mxu0 0.0
    %924 = vmatpush2.msra.mxu0 0.0
    %925 = vmatprep.subr.mxu0 0.0
    %926 = vmatpush2.msra.mxu0 0.0
    %927 = vmatprep.subr.mxu0 0.0
    %928 = vmatpush2.msra.mxu0 0.0
    %929 = vmatprep.subr.mxu0 0.0
    %930 = vmatpush2.msra.mxu0 0.0
    %931 = vmatprep.subr.mxu0 0.0
    %932 = vmatpush2.msra.mxu0 0.0
    %933 = vmatprep.subr.mxu0 0.0
    %934 = vmatpush2.msra.mxu0 0.0
    %935 = vmatprep.subr.mxu0 0.0
    %936 = vmatpush2.msra.mxu0 0.0
    %937 = vmatprep.subr.mxu0 0.0
    %938 = vmatpush2.msra.mxu0 0.0
    %939 = vmatprep.subr.mxu0 0.0
    %940 = vmatpush2.msra.mxu0 0.0
    %941 = vmatprep.subr.mxu0 0.0
    %942 = vmatpush2.msra.mxu0 0.0
    %943 = vmatprep.subr.mxu0 0.0
    %944 = vmatpush2.msra.mxu0 0.0
    %945 = vmatprep.subr.mxu0 0.0
    %946 = vmatpush2.msra.mxu0 0.0
    %947 = vmatprep.subr.mxu0 0.0
    %948 = vmatpush2.msra.mxu0 0.0
    %949 = vmatprep.subr.mxu0 0.0
    %950 = vmatpush2.msra.mxu0 0.0
    %951 = vmatprep.subr.mxu0 0.0
    %952 = vmatpush2.msra.mxu0 0.0
    %953 = vmatprep.subr.mxu0 0.0
    %954 = vmatpush2.msra.mxu0 0.0
    %955 = vmatprep.mubr.f32.mxu0 0.0
    %956 = vmatmul.mubr.f32.gmra.mxu0 %v815
    %v957 = vpop.f32.mrf.mxu0
    %v958 = vadd.f32 0.0, %v957
    %v959 = vpop.f32.mrf.mxu0
    %v960 = vadd.f32 0.0, %v959
    %961 = vdwg.mxu0
    %v962 = vadd.f32 %v816, %v887
    %v963 = vadd.f32 %v817, %v889
    %v964 = vadd.f32 %v818, %v958
    %v965 = vadd.f32 %v819, %v960
    %v966 = vmul.f32 %v962, 0.5
    %v967 = vmul.f32 %v963, 0.5
    %v968 = vmul.f32 %v964, 0.5
    %v969 = vtanh.pop %v966
    %v970 = vtanh.pop %v967
    %v971 = vtanh.pop %v968
    %v972 = vadd.f32 %v969, 1.0
    %v973 = vadd.f32 %v970, 1.0
    %v974 = vadd.f32 %v971, 1.0
    %v975 = vmul.f32 %v972, 0.5
    %v976 = vmul.f32 %v973, 0.5
    %v977 = vmul.f32 %v974, 0.5
    %v978 = vtanh.pop %v965
    %v979 = vmul.f32 %v976, %v813
    %v980 = vmul.f32 %v975, %v978
    %v981 = vadd.f32 %v979, %v980
    %v982 = vtanh.pop %v981
    %v983 = vmul.f32 %v977, %v982
    %v984 = vld [vmem:[#allocation2 + $0x60] sm:$0xff]
    %v985 = vld [vmem:[#allocation2 + $0x68] sm:$0xff]
    %v986 = vld [vmem:[#allocation2 + $0x70] sm:$0xff]
    %v987 = vld [vmem:[#allocation2 + $0x78] sm:$0xff]
    %988 = vmatprep.subr.mxu0 %v481
    %989 = vmatpush1.msra.mxu0 %v480
    %990 = vmatprep.subr.mxu0 %v477
    %991 = vmatpush1.msra.mxu0 %v476
    %992 = vmatprep.subr.mxu0 %v473
    %993 = vmatpush1.msra.mxu0 %v472
    %994 = vmatprep.subr.mxu0 %v469
    %995 = vmatpush1.msra.mxu0 %v468
    %996 = vmatprep.subr.mxu0 %v465
    %997 = vmatpush1.msra.mxu0 %v464
    %998 = vmatprep.subr.mxu0 %v461
    %999 = vmatpush1.msra.mxu0 %v460
    %1000 = vmatprep.subr.mxu0 %v457
    %1001 = vmatpush1.msra.mxu0 %v456
    %1002 = vmatprep.subr.mxu0 %v453
    %1003 = vmatpush1.msra.mxu0 %v452
    %1004 = vmatprep.subr.mxu0 %v449
    %1005 = vmatpush1.msra.mxu0 %v448
    %1006 = vmatprep.subr.mxu0 %v445
    %1007 = vmatpush1.msra.mxu0 %v444
    %1008 = vmatprep.subr.mxu0 %v441
    %1009 = vmatpush1.msra.mxu0 %v440
    %1010 = vmatprep.subr.mxu0 %v437
    %1011 = vmatpush1.msra.mxu0 %v436
    %1012 = vmatprep.subr.mxu0 %v433
    %1013 = vmatpush1.msra.mxu0 %v432
    %1014 = vmatprep.subr.mxu0 %v429
    %1015 = vmatpush1.msra.mxu0 %v428
    %1016 = vmatprep.subr.mxu0 %v425
    %1017 = vmatpush1.msra.mxu0 %v424
    %1018 = vmatprep.subr.mxu0 %v421
    %1019 = vmatpush1.msra.mxu0 %v420
    %1020 = vmatprep.subr.mxu0 0.0
    %1021 = vmatpush2.msra.mxu0 0.0
    %1022 = vmatprep.subr.mxu0 0.0
    %1023 = vmatpush2.msra.mxu0 0.0
    %1024 = vmatprep.subr.mxu0 0.0
    %1025 = vmatpush2.msra.mxu0 0.0
    %1026 = vmatprep.subr.mxu0 0.0
    %1027 = vmatpush2.msra.mxu0 0.0
    %1028 = vmatprep.subr.mxu0 0.0
    %1029 = vmatpush2.msra.mxu0 0.0
    %1030 = vmatprep.subr.mxu0 0.0
    %1031 = vmatpush2.msra.mxu0 0.0
    %1032 = vmatprep.subr.mxu0 0.0
    %1033 = vmatpush2.msra.mxu0 0.0
    %1034 = vmatprep.subr.mxu0 0.0
    %1035 = vmatpush2.msra.mxu0 0.0
    %1036 = vmatprep.subr.mxu0 0.0
    %1037 = vmatpush2.msra.mxu0 0.0
    %1038 = vmatprep.subr.mxu0 0.0
    %1039 = vmatpush2.msra.mxu0 0.0
    %1040 = vmatprep.subr.mxu0 0.0
    %1041 = vmatpush2.msra.mxu0 0.0
    %1042 = vmatprep.subr.mxu0 0.0
    %1043 = vmatpush2.msra.mxu0 0.0
    %1044 = vmatprep.subr.mxu0 0.0
    %1045 = vmatpush2.msra.mxu0 0.0
    %1046 = vmatprep.subr.mxu0 0.0
    %1047 = vmatpush2.msra.mxu0 0.0
    %1048 = vmatprep.subr.mxu0 0.0
    %1049 = vmatpush2.msra.mxu0 0.0
    %1050 = vmatprep.subr.mxu0 0.0
    %1051 = vmatpush2.msra.mxu0 0.0
    %1052 = vmatprep.mubr.f32.mxu0 0.0
    %1053 = vmatmul.mubr.f32.gmra.mxu0 %v983
    %v1054 = vpop.f32.mrf.mxu0
    %v1055 = vadd.f32 0.0, %v1054
    %v1056 = vpop.f32.mrf.mxu0
    %v1057 = vadd.f32 0.0, %v1056
    %1058 = vdwg.mxu0
    %1059 = vmatprep.subr.mxu0 %v483
    %1060 = vmatpush1.msra.mxu0 %v482
    %1061 = vmatprep.subr.mxu0 %v479
    %1062 = vmatpush1.msra.mxu0 %v478
    %1063 = vmatprep.subr.mxu0 %v475
    %1064 = vmatpush1.msra.mxu0 %v474
    %1065 = vmatprep.subr.mxu0 %v471
    %1066 = vmatpush1.msra.mxu0 %v470
    %1067 = vmatprep.subr.mxu0 %v467
    %1068 = vmatpush1.msra.mxu0 %v466
    %1069 = vmatprep.subr.mxu0 %v463
    %1070 = vmatpush1.msra.mxu0 %v462
    %1071 = vmatprep.subr.mxu0 %v459
    %1072 = vmatpush1.msra.mxu0 %v458
    %1073 = vmatprep.subr.mxu0 %v455
    %1074 = vmatpush1.msra.mxu0 %v454
    %1075 = vmatprep.subr.mxu0 %v451
    %1076 = vmatpush1.msra.mxu0 %v450
    %1077 = vmatprep.subr.mxu0 %v447
    %1078 = vmatpush1.msra.mxu0 %v446
    %1079 = vmatprep.subr.mxu0 %v443
    %1080 = vmatpush1.msra.mxu0 %v442
    %1081 = vmatprep.subr.mxu0 %v439
    %1082 = vmatpush1.msra.mxu0 %v438
    %1083 = vmatprep.subr.mxu0 %v435
    %1084 = vmatpush1.msra.mxu0 %v434
    %1085 = vmatprep.subr.mxu0 %v431
    %1086 = vmatpush1.msra.mxu0 %v430
    %1087 = vmatprep.subr.mxu0 %v427
    %1088 = vmatpush1.msra.mxu0 %v426
    %1089 = vmatprep.subr.mxu0 %v423
    %1090 = vmatpush1.msra.mxu0 %v422
    %1091 = vmatprep.subr.mxu0 0.0
    %1092 = vmatpush2.msra.mxu0 0.0
    %1093 = vmatprep.subr.mxu0 0.0
    %1094 = vmatpush2.msra.mxu0 0.0
    %1095 = vmatprep.subr.mxu0 0.0
    %1096 = vmatpush2.msra.mxu0 0.0
    %1097 = vmatprep.subr.mxu0 0.0
    %1098 = vmatpush2.msra.mxu0 0.0
    %1099 = vmatprep.subr.mxu0 0.0
    %1100 = vmatpush2.msra.mxu0 0.0
    %1101 = vmatprep.subr.mxu0 0.0
    %1102 = vmatpush2.msra.mxu0 0.0
    %1103 = vmatprep.subr.mxu0 0.0
    %1104 = vmatpush2.msra.mxu0 0.0
    %1105 = vmatprep.subr.mxu0 0.0
    %1106 = vmatpush2.msra.mxu0 0.0
    %1107 = vmatprep.subr.mxu0 0.0
    %1108 = vmatpush2.msra.mxu0 0.0
    %1109 = vmatprep.subr.mxu0 0.0
    %1110 = vmatpush2.msra.mxu0 0.0
    %1111 = vmatprep.subr.mxu0 0.0
    %1112 = vmatpush2.msra.mxu0 0.0
    %1113 = vmatprep.subr.mxu0 0.0
    %1114 = vmatpush2.msra.mxu0 0.0
    %1115 = vmatprep.subr.mxu0 0.0
    %1116 = vmatpush2.msra.mxu0 0.0
    %1117 = vmatprep.subr.mxu0 0.0
    %1118 = vmatpush2.msra.mxu0 0.0
    %1119 = vmatprep.subr.mxu0 0.0
    %1120 = vmatpush2.msra.mxu0 0.0
    %1121 = vmatprep.subr.mxu0 0.0
    %1122 = vmatpush2.msra.mxu0 0.0
    %1123 = vmatprep.mubr.f32.mxu0 0.0
    %1124 = vmatmul.mubr.f32.gmra.mxu0 %v983
    %v1125 = vpop.f32.mrf.mxu0
    %v1126 = vadd.f32 0.0, %v1125
    %v1127 = vpop.f32.mrf.mxu0
    %v1128 = vadd.f32 0.0, %v1127
    %1129 = vdwg.mxu0
    %v1130 = vadd.f32 %v984, %v1055
    %v1131 = vadd.f32 %v985, %v1057
    %v1132 = vadd.f32 %v986, %v1126
    %v1133 = vadd.f32 %v987, %v1128
    %v1134 = vmul.f32 %v1130, 0.5
    %v1135 = vmul.f32 %v1131, 0.5
    %v1136 = vmul.f32 %v1132, 0.5
    %v1137 = vtanh.pop %v1134
    %v1138 = vtanh.pop %v1135
    %v1139 = vtanh.pop %v1136
    %v1140 = vadd.f32 %v1137, 1.0
    %v1141 = vadd.f32 %v1138, 1.0
    %v1142 = vadd.f32 %v1139, 1.0
    %v1143 = vmul.f32 %v1140, 0.5
    %v1144 = vmul.f32 %v1141, 0.5
    %v1145 = vmul.f32 %v1142, 0.5
    %v1146 = vtanh.pop %v1133
    %v1147 = vmul.f32 %v1144, %v981
    %v1148 = vmul.f32 %v1143, %v1146
    %v1149 = vadd.f32 %v1147, %v1148
    %v1150 = vtanh.pop %v1149
    %v1151 = vmul.f32 %v1145, %v1150
    %v1152 = vld [vmem:[#allocation2 + $0x80] sm:$0xff]
    %v1153 = vld [vmem:[#allocation2 + $0x88] sm:$0xff]
    %v1154 = vld [vmem:[#allocation2 + $0x90] sm:$0xff]
    %v1155 = vld [vmem:[#allocation2 + $0x98] sm:$0xff]
    %1156 = vmatprep.subr.mxu0 %v481
    %1157 = vmatpush1.msra.mxu0 %v480
    %1158 = vmatprep.subr.mxu0 %v477
    %1159 = vmatpush1.msra.mxu0 %v476
    %1160 = vmatprep.subr.mxu0 %v473
    %1161 = vmatpush1.msra.mxu0 %v472
    %1162 = vmatprep.subr.mxu0 %v469
    %1163 = vmatpush1.msra.mxu0 %v468
    %1164 = vmatprep.subr.mxu0 %v465
    %1165 = vmatpush1.msra.mxu0 %v464
    %1166 = vmatprep.subr.mxu0 %v461
    %1167 = vmatpush1.msra.mxu0 %v460
    %1168 = vmatprep.subr.mxu0 %v457
    %1169 = vmatpush1.msra.mxu0 %v456
    %1170 = vmatprep.subr.mxu0 %v453
    %1171 = vmatpush1.msra.mxu0 %v452
    %1172 = vmatprep.subr.mxu0 %v449
    %1173 = vmatpush1.msra.mxu0 %v448
    %1174 = vmatprep.subr.mxu0 %v445
    %1175 = vmatpush1.msra.mxu0 %v444
    %1176 = vmatprep.subr.mxu0 %v441
    %1177 = vmatpush1.msra.mxu0 %v440
    %1178 = vmatprep.subr.mxu0 %v437
    %1179 = vmatpush1.msra.mxu0 %v436
    %1180 = vmatprep.subr.mxu0 %v433
    %1181 = vmatpush1.msra.mxu0 %v432
    %1182 = vmatprep.subr.mxu0 %v429
    %1183 = vmatpush1.msra.mxu0 %v428
    %1184 = vmatprep.subr.mxu0 %v425
    %1185 = vmatpush1.msra.mxu0 %v424
    %1186 = vmatprep.subr.mxu0 %v421
    %1187 = vmatpush1.msra.mxu0 %v420
    %1188 = vmatprep.subr.mxu0 0.0
    %1189 = vmatpush2.msra.mxu0 0.0
    %1190 = vmatprep.subr.mxu0 0.0
    %1191 = vmatpush2.msra.mxu0 0.0
    %1192 = vmatprep.subr.mxu0 0.0
    %1193 = vmatpush2.msra.mxu0 0.0
    %1194 = vmatprep.subr.mxu0 0.0
    %1195 = vmatpush2.msra.mxu0 0.0
    %1196 = vmatprep.subr.mxu0 0.0
    %1197 = vmatpush2.msra.mxu0 0.0
    %1198 = vmatprep.subr.mxu0 0.0
    %1199 = vmatpush2.msra.mxu0 0.0
    %1200 = vmatprep.subr.mxu0 0.0
    %1201 = vmatpush2.msra.mxu0 0.0
    %1202 = vmatprep.subr.mxu0 0.0
    %1203 = vmatpush2.msra.mxu0 0.0
    %1204 = vmatprep.subr.mxu0 0.0
    %1205 = vmatpush2.msra.mxu0 0.0
    %1206 = vmatprep.subr.mxu0 0.0
    %1207 = vmatpush2.msra.mxu0 0.0
    %1208 = vmatprep.subr.mxu0 0.0
    %1209 = vmatpush2.msra.mxu0 0.0
    %1210 = vmatprep.subr.mxu0 0.0
    %1211 = vmatpush2.msra.mxu0 0.0
    %1212 = vmatprep.subr.mxu0 0.0
    %1213 = vmatpush2.msra.mxu0 0.0
    %1214 = vmatprep.subr.mxu0 0.0
    %1215 = vmatpush2.msra.mxu0 0.0
    %1216 = vmatprep.subr.mxu0 0.0
    %1217 = vmatpush2.msra.mxu0 0.0
    %1218 = vmatprep.subr.mxu0 0.0
    %1219 = vmatpush2.msra.mxu0 0.0
    %1220 = vmatprep.mubr.f32.mxu0 0.0
    %1221 = vmatmul.mubr.f32.gmra.mxu0 %v1151
    %v1222 = vpop.f32.mrf.mxu0
    %v1223 = vadd.f32 0.0, %v1222
    %v1224 = vpop.f32.mrf.mxu0
    %v1225 = vadd.f32 0.0, %v1224
    %1226 = vdwg.mxu0
    %1227 = vmatprep.subr.mxu0 %v483
    %1228 = vmatpush1.msra.mxu0 %v482
    %1229 = vmatprep.subr.mxu0 %v479
    %1230 = vmatpush1.msra.mxu0 %v478
    %1231 = vmatprep.subr.mxu0 %v475
    %1232 = vmatpush1.msra.mxu0 %v474
    %1233 = vmatprep.subr.mxu0 %v471
    %1234 = vmatpush1.msra.mxu0 %v470
    %1235 = vmatprep.subr.mxu0 %v467
    %1236 = vmatpush1.msra.mxu0 %v466
    %1237 = vmatprep.subr.mxu0 %v463
    %1238 = vmatpush1.msra.mxu0 %v462
    %1239 = vmatprep.subr.mxu0 %v459
    %1240 = vmatpush1.msra.mxu0 %v458
    %1241 = vmatprep.subr.mxu0 %v455
    %1242 = vmatpush1.msra.mxu0 %v454
    %1243 = vmatprep.subr.mxu0 %v451
    %1244 = vmatpush1.msra.mxu0 %v450
    %1245 = vmatprep.subr.mxu0 %v447
    %1246 = vmatpush1.msra.mxu0 %v446
    %1247 = vmatprep.subr.mxu0 %v443
    %1248 = vmatpush1.msra.mxu0 %v442
    %1249 = vmatprep.subr.mxu0 %v439
    %1250 = vmatpush1.msra.mxu0 %v438
    %1251 = vmatprep.subr.mxu0 %v435
    %1252 = vmatpush1.msra.mxu0 %v434
    %1253 = vmatprep.subr.mxu0 %v431
    %1254 = vmatpush1.msra.mxu0 %v430
    %1255 = vmatprep.subr.mxu0 %v427
    %1256 = vmatpush1.msra.mxu0 %v426
    %1257 = vmatprep.subr.mxu0 %v423
    %1258 = vmatpush1.msra.mxu0 %v422
    %1259 = vmatprep.subr.mxu0 0.0
    %1260 = vmatpush2.msra.mxu0 0.0
    %1261 = vmatprep.subr.mxu0 0.0
    %1262 = vmatpush2.msra.mxu0 0.0
    %1263 = vmatprep.subr.mxu0 0.0
    %1264 = vmatpush2.msra.mxu0 0.0
    %1265 = vmatprep.subr.mxu0 0.0
    %1266 = vmatpush2.msra.mxu0 0.0
    %1267 = vmatprep.subr.mxu0 0.0
    %1268 = vmatpush2.msra.mxu0 0.0
    %1269 = vmatprep.subr.mxu0 0.0
    %1270 = vmatpush2.msra.mxu0 0.0
    %1271 = vmatprep.subr.mxu0 0.0
    %1272 = vmatpush2.msra.mxu0 0.0
    %1273 = vmatprep.subr.mxu0 0.0
    %1274 = vmatpush2.msra.mxu0 0.0
    %1275 = vmatprep.subr.mxu0 0.0
    %1276 = vmatpush2.msra.mxu0 0.0
    %1277 = vmatprep.subr.mxu0 0.0
    %1278 = vmatpush2.msra.mxu0 0.0
    %1279 = vmatprep.subr.mxu0 0.0
    %1280 = vmatpush2.msra.mxu0 0.0
    %1281 = vmatprep.subr.mxu0 0.0
    %1282 = vmatpush2.msra.mxu0 0.0
    %1283 = vmatprep.subr.mxu0 0.0
    %1284 = vmatpush2.msra.mxu0 0.0
    %1285 = vmatprep.subr.mxu0 0.0
    %1286 = vmatpush2.msra.mxu0 0.0
    %1287 = vmatprep.subr.mxu0 0.0
    %1288 = vmatpush2.msra.mxu0 0.0
    %1289 = vmatprep.subr.mxu0 0.0
    %1290 = vmatpush2.msra.mxu0 0.0
    %1291 = vmatprep.mubr.f32.mxu0 0.0
    %1292 = vmatmul.mubr.f32.gmra.mxu0 %v1151
    %v1293 = vpop.f32.mrf.mxu0
    %v1294 = vadd.f32 0.0, %v1293
    %v1295 = vpop.f32.mrf.mxu0
    %v1296 = vadd.f32 0.0, %v1295
    %1297 = vdwg.mxu0
    %v1298 = vadd.f32 %v1152, %v1223
    %v1299 = vadd.f32 %v1153, %v1225
    %v1300 = vadd.f32 %v1154, %v1294
    %v1301 = vadd.f32 %v1155, %v1296
    %v1302 = vmul.f32 %v1298, 0.5
    %v1303 = vmul.f32 %v1299, 0.5
    %v1304 = vmul.f32 %v1300, 0.5
    %v1305 = vtanh.pop %v1302
    %v1306 = vtanh.pop %v1303
    %v1307 = vtanh.pop %v1304
    %v1308 = vadd.f32 %v1305, 1.0
    %v1309 = vadd.f32 %v1306, 1.0
    %v1310 = vadd.f32 %v1307, 1.0
    %v1311 = vmul.f32 %v1308, 0.5
    %v1312 = vmul.f32 %v1309, 0.5
    %v1313 = vmul.f32 %v1310, 0.5
    %v1314 = vtanh.pop %v1301
    %v1315 = vmul.f32 %v1312, %v1149
    %v1316 = vmul.f32 %v1311, %v1314
    %v1317 = vadd.f32 %v1315, %v1316
    %v1318 = vtanh.pop %v1317
    %v1319 = vmul.f32 %v1313, %v1318
    %v1320 = vld [vmem:[#allocation2 + $0xa0] sm:$0xff]
    %v1321 = vld [vmem:[#allocation2 + $0xa8] sm:$0xff]
    %v1322 = vld [vmem:[#allocation2 + $0xb0] sm:$0xff]
    %v1323 = vld [vmem:[#allocation2 + $0xb8] sm:$0xff]
    %1324 = vmatprep.subr.mxu0 %v481
    %1325 = vmatpush1.msra.mxu0 %v480
    %1326 = vmatprep.subr.mxu0 %v477
    %1327 = vmatpush1.msra.mxu0 %v476
    %1328 = vmatprep.subr.mxu0 %v473
    %1329 = vmatpush1.msra.mxu0 %v472
    %1330 = vmatprep.subr.mxu0 %v469
    %1331 = vmatpush1.msra.mxu0 %v468
    %1332 = vmatprep.subr.mxu0 %v465
    %1333 = vmatpush1.msra.mxu0 %v464
    %1334 = vmatprep.subr.mxu0 %v461
    %1335 = vmatpush1.msra.mxu0 %v460
    %1336 = vmatprep.subr.mxu0 %v457
    %1337 = vmatpush1.msra.mxu0 %v456
    %1338 = vmatprep.subr.mxu0 %v453
    %1339 = vmatpush1.msra.mxu0 %v452
    %1340 = vmatprep.subr.mxu0 %v449
    %1341 = vmatpush1.msra.mxu0 %v448
    %1342 = vmatprep.subr.mxu0 %v445
    %1343 = vmatpush1.msra.mxu0 %v444
    %1344 = vmatprep.subr.mxu0 %v441
    %1345 = vmatpush1.msra.mxu0 %v440
    %1346 = vmatprep.subr.mxu0 %v437
    %1347 = vmatpush1.msra.mxu0 %v436
    %1348 = vmatprep.subr.mxu0 %v433
    %1349 = vmatpush1.msra.mxu0 %v432
    %1350 = vmatprep.subr.mxu0 %v429
    %1351 = vmatpush1.msra.mxu0 %v428
    %1352 = vmatprep.subr.mxu0 %v425
    %1353 = vmatpush1.msra.mxu0 %v424
    %1354 = vmatprep.subr.mxu0 %v421
    %1355 = vmatpush1.msra.mxu0 %v420
    %1356 = vmatprep.subr.mxu0 0.0
    %1357 = vmatpush2.msra.mxu0 0.0
    %1358 = vmatprep.subr.mxu0 0.0
    %1359 = vmatpush2.msra.mxu0 0.0
    %1360 = vmatprep.subr.mxu0 0.0
    %1361 = vmatpush2.msra.mxu0 0.0
    %1362 = vmatprep.subr.mxu0 0.0
    %1363 = vmatpush2.msra.mxu0 0.0
    %1364 = vmatprep.subr.mxu0 0.0
    %1365 = vmatpush2.msra.mxu0 0.0
    %1366 = vmatprep.subr.mxu0 0.0
    %1367 = vmatpush2.msra.mxu0 0.0
    %1368 = vmatprep.subr.mxu0 0.0
    %1369 = vmatpush2.msra.mxu0 0.0
    %1370 = vmatprep.subr.mxu0 0.0
    %1371 = vmatpush2.msra.mxu0 0.0
    %1372 = vmatprep.subr.mxu0 0.0
    %1373 = vmatpush2.msra.mxu0 0.0
    %1374 = vmatprep.subr.mxu0 0.0
    %1375 = vmatpush2.msra.mxu0 0.0
    %1376 = vmatprep.subr.mxu0 0.0
    %1377 = vmatpush2.msra.mxu0 0.0
    %1378 = vmatprep.subr.mxu0 0.0
    %1379 = vmatpush2.msra.mxu0 0.0
    %1380 = vmatprep.subr.mxu0 0.0
    %1381 = vmatpush2.msra.mxu0 0.0
    %1382 = vmatprep.subr.mxu0 0.0
    %1383 = vmatpush2.msra.mxu0 0.0
    %1384 = vmatprep.subr.mxu0 0.0
    %1385 = vmatpush2.msra.mxu0 0.0
    %1386 = vmatprep.subr.mxu0 0.0
    %1387 = vmatpush2.msra.mxu0 0.0
    %1388 = vmatprep.mubr.f32.mxu0 0.0
    %1389 = vmatmul.mubr.f32.gmra.mxu0 %v1319
    %v1390 = vpop.f32.mrf.mxu0
    %v1391 = vadd.f32 0.0, %v1390
    %v1392 = vpop.f32.mrf.mxu0
    %v1393 = vadd.f32 0.0, %v1392
    %1394 = vdwg.mxu0
    %1395 = vmatprep.subr.mxu0 %v483
    %1396 = vmatpush1.msra.mxu0 %v482
    %1397 = vmatprep.subr.mxu0 %v479
    %1398 = vmatpush1.msra.mxu0 %v478
    %1399 = vmatprep.subr.mxu0 %v475
    %1400 = vmatpush1.msra.mxu0 %v474
    %1401 = vmatprep.subr.mxu0 %v471
    %1402 = vmatpush1.msra.mxu0 %v470
    %1403 = vmatprep.subr.mxu0 %v467
    %1404 = vmatpush1.msra.mxu0 %v466
    %1405 = vmatprep.subr.mxu0 %v463
    %1406 = vmatpush1.msra.mxu0 %v462
    %1407 = vmatprep.subr.mxu0 %v459
    %1408 = vmatpush1.msra.mxu0 %v458
    %1409 = vmatprep.subr.mxu0 %v455
    %1410 = vmatpush1.msra.mxu0 %v454
    %1411 = vmatprep.subr.mxu0 %v451
    %1412 = vmatpush1.msra.mxu0 %v450
    %1413 = vmatprep.subr.mxu0 %v447
    %1414 = vmatpush1.msra.mxu0 %v446
    %1415 = vmatprep.subr.mxu0 %v443
    %1416 = vmatpush1.msra.mxu0 %v442
    %1417 = vmatprep.subr.mxu0 %v439
    %1418 = vmatpush1.msra.mxu0 %v438
    %1419 = vmatprep.subr.mxu0 %v435
    %1420 = vmatpush1.msra.mxu0 %v434
    %1421 = vmatprep.subr.mxu0 %v431
    %1422 = vmatpush1.msra.mxu0 %v430
    %1423 = vmatprep.subr.mxu0 %v427
    %1424 = vmatpush1.msra.mxu0 %v426
    %1425 = vmatprep.subr.mxu0 %v423
    %1426 = vmatpush1.msra.mxu0 %v422
    %1427 = vmatprep.subr.mxu0 0.0
    %1428 = vmatpush2.msra.mxu0 0.0
    %1429 = vmatprep.subr.mxu0 0.0
    %1430 = vmatpush2.msra.mxu0 0.0
    %1431 = vmatprep.subr.mxu0 0.0
    %1432 = vmatpush2.msra.mxu0 0.0
    %1433 = vmatprep.subr.mxu0 0.0
    %1434 = vmatpush2.msra.mxu0 0.0
    %1435 = vmatprep.subr.mxu0 0.0
    %1436 = vmatpush2.msra.mxu0 0.0
    %1437 = vmatprep.subr.mxu0 0.0
    %1438 = vmatpush2.msra.mxu0 0.0
    %1439 = vmatprep.subr.mxu0 0.0
    %1440 = vmatpush2.msra.mxu0 0.0
    %1441 = vmatprep.subr.mxu0 0.0
    %1442 = vmatpush2.msra.mxu0 0.0
    %1443 = vmatprep.subr.mxu0 0.0
    %1444 = vmatpush2.msra.mxu0 0.0
    %1445 = vmatprep.subr.mxu0 0.0
    %1446 = vmatpush2.msra.mxu0 0.0
    %1447 = vmatprep.subr.mxu0 0.0
    %1448 = vmatpush2.msra.mxu0 0.0
    %1449 = vmatprep.subr.mxu0 0.0
    %1450 = vmatpush2.msra.mxu0 0.0
    %1451 = vmatprep.subr.mxu0 0.0
    %1452 = vmatpush2.msra.mxu0 0.0
    %1453 = vmatprep.subr.mxu0 0.0
    %1454 = vmatpush2.msra.mxu0 0.0
    %1455 = vmatprep.subr.mxu0 0.0
    %1456 = vmatpush2.msra.mxu0 0.0
    %1457 = vmatprep.subr.mxu0 0.0
    %1458 = vmatpush2.msra.mxu0 0.0
    %1459 = vmatprep.mubr.f32.mxu0 0.0
    %1460 = vmatmul.mubr.f32.gmra.mxu0 %v1319
    %v1461 = vpop.f32.mrf.mxu0
    %v1462 = vadd.f32 0.0, %v1461
    %v1463 = vpop.f32.mrf.mxu0
    %v1464 = vadd.f32 0.0, %v1463
    %1465 = vdwg.mxu0
    %v1466 = vadd.f32 %v1320, %v1391
    %v1467 = vadd.f32 %v1321, %v1393
    %v1468 = vadd.f32 %v1322, %v1462
    %v1469 = vadd.f32 %v1323, %v1464
    %v1470 = vmul.f32 %v1466, 0.5
    %v1471 = vmul.f32 %v1467, 0.5
    %v1472 = vmul.f32 %v1468, 0.5
    %v1473 = vtanh.pop %v1470
    %v1474 = vtanh.pop %v1471
    %v1475 = vtanh.pop %v1472
    %v1476 = vadd.f32 %v1473, 1.0
    %v1477 = vadd.f32 %v1474, 1.0
    %v1478 = vadd.f32 %v1475, 1.0
    %v1479 = vmul.f32 %v1476, 0.5
    %v1480 = vmul.f32 %v1477, 0.5
    %v1481 = vmul.f32 %v1478, 0.5
    %v1482 = vtanh.pop %v1469
    %v1483 = vmul.f32 %v1480, %v1317
    %v1484 = vmul.f32 %v1479, %v1482
    %v1485 = vadd.f32 %v1483, %v1484
    %v1486 = vtanh.pop %v1485
    %v1487 = vmul.f32 %v1481, %v1486
    %v1488 = vld [vmem:[#allocation2 + $0xc0] sm:$0xff]
    %v1489 = vld [vmem:[#allocation2 + $0xc8] sm:$0xff]
    %v1490 = vld [vmem:[#allocation2 + $0xd0] sm:$0xff]
    %v1491 = vld [vmem:[#allocation2 + $0xd8] sm:$0xff]
    %1492 = vmatprep.subr.mxu0 %v481
    %1493 = vmatpush1.msra.mxu0 %v480
    %1494 = vmatprep.subr.mxu0 %v477
    %1495 = vmatpush1.msra.mxu0 %v476
    %1496 = vmatprep.subr.mxu0 %v473
    %1497 = vmatpush1.msra.mxu0 %v472
    %1498 = vmatprep.subr.mxu0 %v469
    %1499 = vmatpush1.msra.mxu0 %v468
    %1500 = vmatprep.subr.mxu0 %v465
    %1501 = vmatpush1.msra.mxu0 %v464
    %1502 = vmatprep.subr.mxu0 %v461
    %1503 = vmatpush1.msra.mxu0 %v460
    %1504 = vmatprep.subr.mxu0 %v457
    %1505 = vmatpush1.msra.mxu0 %v456
    %1506 = vmatprep.subr.mxu0 %v453
    %1507 = vmatpush1.msra.mxu0 %v452
    %1508 = vmatprep.subr.mxu0 %v449
    %1509 = vmatpush1.msra.mxu0 %v448
    %1510 = vmatprep.subr.mxu0 %v445
    %1511 = vmatpush1.msra.mxu0 %v444
    %1512 = vmatprep.subr.mxu0 %v441
    %1513 = vmatpush1.msra.mxu0 %v440
    %1514 = vmatprep.subr.mxu0 %v437
    %1515 = vmatpush1.msra.mxu0 %v436
    %1516 = vmatprep.subr.mxu0 %v433
    %1517 = vmatpush1.msra.mxu0 %v432
    %1518 = vmatprep.subr.mxu0 %v429
    %1519 = vmatpush1.msra.mxu0 %v428
    %1520 = vmatprep.subr.mxu0 %v425
    %1521 = vmatpush1.msra.mxu0 %v424
    %1522 = vmatprep.subr.mxu0 %v421
    %1523 = vmatpush1.msra.mxu0 %v420
    %1524 = vmatprep.subr.mxu0 0.0
    %1525 = vmatpush2.msra.mxu0 0.0
    %1526 = vmatprep.subr.mxu0 0.0
    %1527 = vmatpush2.msra.mxu0 0.0
    %1528 = vmatprep.subr.mxu0 0.0
    %1529 = vmatpush2.msra.mxu0 0.0
    %1530 = vmatprep.subr.mxu0 0.0
    %1531 = vmatpush2.msra.mxu0 0.0
    %1532 = vmatprep.subr.mxu0 0.0
    %1533 = vmatpush2.msra.mxu0 0.0
    %1534 = vmatprep.subr.mxu0 0.0
    %1535 = vmatpush2.msra.mxu0 0.0
    %1536 = vmatprep.subr.mxu0 0.0
    %1537 = vmatpush2.msra.mxu0 0.0
    %1538 = vmatprep.subr.mxu0 0.0
    %1539 = vmatpush2.msra.mxu0 0.0
    %1540 = vmatprep.subr.mxu0 0.0
    %1541 = vmatpush2.msra.mxu0 0.0
    %1542 = vmatprep.subr.mxu0 0.0
    %1543 = vmatpush2.msra.mxu0 0.0
    %1544 = vmatprep.subr.mxu0 0.0
    %1545 = vmatpush2.msra.mxu0 0.0
    %1546 = vmatprep.subr.mxu0 0.0
    %1547 = vmatpush2.msra.mxu0 0.0
    %1548 = vmatprep.subr.mxu0 0.0
    %1549 = vmatpush2.msra.mxu0 0.0
    %1550 = vmatprep.subr.mxu0 0.0
    %1551 = vmatpush2.msra.mxu0 0.0
    %1552 = vmatprep.subr.mxu0 0.0
    %1553 = vmatpush2.msra.mxu0 0.0
    %1554 = vmatprep.subr.mxu0 0.0
    %1555 = vmatpush2.msra.mxu0 0.0
    %1556 = vmatprep.mubr.f32.mxu0 0.0
    %1557 = vmatmul.mubr.f32.gmra.mxu0 %v1487
    %v1558 = vpop.f32.mrf.mxu0
    %v1559 = vadd.f32 0.0, %v1558
    %v1560 = vpop.f32.mrf.mxu0
    %v1561 = vadd.f32 0.0, %v1560
    %1562 = vdwg.mxu0
    %1563 = vmatprep.subr.mxu0 %v483
    %1564 = vmatpush1.msra.mxu0 %v482
    %1565 = vmatprep.subr.mxu0 %v479
    %1566 = vmatpush1.msra.mxu0 %v478
    %1567 = vmatprep.subr.mxu0 %v475
    %1568 = vmatpush1.msra.mxu0 %v474
    %1569 = vmatprep.subr.mxu0 %v471
    %1570 = vmatpush1.msra.mxu0 %v470
    %1571 = vmatprep.subr.mxu0 %v467
    %1572 = vmatpush1.msra.mxu0 %v466
    %1573 = vmatprep.subr.mxu0 %v463
    %1574 = vmatpush1.msra.mxu0 %v462
    %1575 = vmatprep.subr.mxu0 %v459
    %1576 = vmatpush1.msra.mxu0 %v458
    %1577 = vmatprep.subr.mxu0 %v455
    %1578 = vmatpush1.msra.mxu0 %v454
    %1579 = vmatprep.subr.mxu0 %v451
    %1580 = vmatpush1.msra.mxu0 %v450
    %1581 = vmatprep.subr.mxu0 %v447
    %1582 = vmatpush1.msra.mxu0 %v446
    %1583 = vmatprep.subr.mxu0 %v443
    %1584 = vmatpush1.msra.mxu0 %v442
    %1585 = vmatprep.subr.mxu0 %v439
    %1586 = vmatpush1.msra.mxu0 %v438
    %1587 = vmatprep.subr.mxu0 %v435
    %1588 = vmatpush1.msra.mxu0 %v434
    %1589 = vmatprep.subr.mxu0 %v431
    %1590 = vmatpush1.msra.mxu0 %v430
    %1591 = vmatprep.subr.mxu0 %v427
    %1592 = vmatpush1.msra.mxu0 %v426
    %1593 = vmatprep.subr.mxu0 %v423
    %1594 = vmatpush1.msra.mxu0 %v422
    %1595 = vmatprep.subr.mxu0 0.0
    %1596 = vmatpush2.msra.mxu0 0.0
    %1597 = vmatprep.subr.mxu0 0.0
    %1598 = vmatpush2.msra.mxu0 0.0
    %1599 = vmatprep.subr.mxu0 0.0
    %1600 = vmatpush2.msra.mxu0 0.0
    %1601 = vmatprep.subr.mxu0 0.0
    %1602 = vmatpush2.msra.mxu0 0.0
    %1603 = vmatprep.subr.mxu0 0.0
    %1604 = vmatpush2.msra.mxu0 0.0
    %1605 = vmatprep.subr.mxu0 0.0
    %1606 = vmatpush2.msra.mxu0 0.0
    %1607 = vmatprep.subr.mxu0 0.0
    %1608 = vmatpush2.msra.mxu0 0.0
    %1609 = vmatprep.subr.mxu0 0.0
    %1610 = vmatpush2.msra.mxu0 0.0
    %1611 = vmatprep.subr.mxu0 0.0
    %1612 = vmatpush2.msra.mxu0 0.0
    %1613 = vmatprep.subr.mxu0 0.0
    %1614 = vmatpush2.msra.mxu0 0.0
    %1615 = vmatprep.subr.mxu0 0.0
    %1616 = vmatpush2.msra.mxu0 0.0
    %1617 = vmatprep.subr.mxu0 0.0
    %1618 = vmatpush2.msra.mxu0 0.0
    %1619 = vmatprep.subr.mxu0 0.0
    %1620 = vmatpush2.msra.mxu0 0.0
    %1621 = vmatprep.subr.mxu0 0.0
    %1622 = vmatpush2.msra.mxu0 0.0
    %1623 = vmatprep.subr.mxu0 0.0
    %1624 = vmatpush2.msra.mxu0 0.0
    %1625 = vmatprep.subr.mxu0 0.0
    %1626 = vmatpush2.msra.mxu0 0.0
    %1627 = vmatprep.mubr.f32.mxu0 0.0
    %1628 = vmatmul.mubr.f32.gmra.mxu0 %v1487
    %v1629 = vpop.f32.mrf.mxu0
    %v1630 = vadd.f32 0.0, %v1629
    %v1631 = vpop.f32.mrf.mxu0
    %v1632 = vadd.f32 0.0, %v1631
    %1633 = vdwg.mxu0
    %v1634 = vadd.f32 %v1488, %v1559
    %v1635 = vadd.f32 %v1489, %v1561
    %v1636 = vadd.f32 %v1490, %v1630
    %v1637 = vadd.f32 %v1491, %v1632
    %v1638 = vmul.f32 %v1634, 0.5
    %v1639 = vmul.f32 %v1635, 0.5
    %v1640 = vmul.f32 %v1636, 0.5
    %v1641 = vtanh.pop %v1638
    %v1642 = vtanh.pop %v1639
    %v1643 = vtanh.pop %v1640
    %v1644 = vadd.f32 %v1641, 1.0
    %v1645 = vadd.f32 %v1642, 1.0
    %v1646 = vadd.f32 %v1643, 1.0
    %v1647 = vmul.f32 %v1644, 0.5
    %v1648 = vmul.f32 %v1645, 0.5
    %v1649 = vmul.f32 %v1646, 0.5
    %v1650 = vtanh.pop %v1637
    %v1651 = vmul.f32 %v1648, %v1485
    %v1652 = vmul.f32 %v1647, %v1650
    %v1653 = vadd.f32 %v1651, %v1652
    %v1654 = vtanh.pop %v1653
    %v1655 = vmul.f32 %v1649, %v1654
    %v1656 = vld [vmem:[#allocation2 + $0xe0] sm:$0xff]
    %v1657 = vld [vmem:[#allocation2 + $0xe8] sm:$0xff]
    %v1658 = vld [vmem:[#allocation2 + $0xf0] sm:$0xff]
    %v1659 = vld [vmem:[#allocation2 + $0xf8] sm:$0xff]
    %1660 = vmatprep.subr.mxu0 %v481
    %1661 = vmatpush1.msra.mxu0 %v480
    %1662 = vmatprep.subr.mxu0 %v477
    %1663 = vmatpush1.msra.mxu0 %v476
    %1664 = vmatprep.subr.mxu0 %v473
    %1665 = vmatpush1.msra.mxu0 %v472
    %1666 = vmatprep.subr.mxu0 %v469
    %1667 = vmatpush1.msra.mxu0 %v468
    %1668 = vmatprep.subr.mxu0 %v465
    %1669 = vmatpush1.msra.mxu0 %v464
    %1670 = vmatprep.subr.mxu0 %v461
    %1671 = vmatpush1.msra.mxu0 %v460
    %1672 = vmatprep.subr.mxu0 %v457
    %1673 = vmatpush1.msra.mxu0 %v456
    %1674 = vmatprep.subr.mxu0 %v453
    %1675 = vmatpush1.msra.mxu0 %v452
    %1676 = vmatprep.subr.mxu0 %v449
    %1677 = vmatpush1.msra.mxu0 %v448
    %1678 = vmatprep.subr.mxu0 %v445
    %1679 = vmatpush1.msra.mxu0 %v444
    %1680 = vmatprep.subr.mxu0 %v441
    %1681 = vmatpush1.msra.mxu0 %v440
    %1682 = vmatprep.subr.mxu0 %v437
    %1683 = vmatpush1.msra.mxu0 %v436
    %1684 = vmatprep.subr.mxu0 %v433
    %1685 = vmatpush1.msra.mxu0 %v432
    %1686 = vmatprep.subr.mxu0 %v429
    %1687 = vmatpush1.msra.mxu0 %v428
    %1688 = vmatprep.subr.mxu0 %v425
    %1689 = vmatpush1.msra.mxu0 %v424
    %1690 = vmatprep.subr.mxu0 %v421
    %1691 = vmatpush1.msra.mxu0 %v420
    %1692 = vmatprep.subr.mxu0 0.0
    %1693 = vmatpush2.msra.mxu0 0.0
    %1694 = vmatprep.subr.mxu0 0.0
    %1695 = vmatpush2.msra.mxu0 0.0
    %1696 = vmatprep.subr.mxu0 0.0
    %1697 = vmatpush2.msra.mxu0 0.0
    %1698 = vmatprep.subr.mxu0 0.0
    %1699 = vmatpush2.msra.mxu0 0.0
    %1700 = vmatprep.subr.mxu0 0.0
    %1701 = vmatpush2.msra.mxu0 0.0
    %1702 = vmatprep.subr.mxu0 0.0
    %1703 = vmatpush2.msra.mxu0 0.0
    %1704 = vmatprep.subr.mxu0 0.0
    %1705 = vmatpush2.msra.mxu0 0.0
    %1706 = vmatprep.subr.mxu0 0.0
    %1707 = vmatpush2.msra.mxu0 0.0
    %1708 = vmatprep.subr.mxu0 0.0
    %1709 = vmatpush2.msra.mxu0 0.0
    %1710 = vmatprep.subr.mxu0 0.0
    %1711 = vmatpush2.msra.mxu0 0.0
    %1712 = vmatprep.subr.mxu0 0.0
    %1713 = vmatpush2.msra.mxu0 0.0
    %1714 = vmatprep.subr.mxu0 0.0
    %1715 = vmatpush2.msra.mxu0 0.0
    %1716 = vmatprep.subr.mxu0 0.0
    %1717 = vmatpush2.msra.mxu0 0.0
    %1718 = vmatprep.subr.mxu0 0.0
    %1719 = vmatpush2.msra.mxu0 0.0
    %1720 = vmatprep.subr.mxu0 0.0
    %1721 = vmatpush2.msra.mxu0 0.0
    %1722 = vmatprep.subr.mxu0 0.0
    %1723 = vmatpush2.msra.mxu0 0.0
    %1724 = vmatprep.mubr.f32.mxu0 0.0
    %1725 = vmatmul.mubr.f32.gmra.mxu0 %v1655
    %v1726 = vpop.f32.mrf.mxu0
    %v1727 = vadd.f32 0.0, %v1726
    %v1728 = vpop.f32.mrf.mxu0
    %v1729 = vadd.f32 0.0, %v1728
    %1730 = vdwg.mxu0
    %1731 = vmatprep.subr.mxu0 %v483
    %1732 = vmatpush1.msra.mxu0 %v482
    %1733 = vmatprep.subr.mxu0 %v479
    %1734 = vmatpush1.msra.mxu0 %v478
    %1735 = vmatprep.subr.mxu0 %v475
    %1736 = vmatpush1.msra.mxu0 %v474
    %1737 = vmatprep.subr.mxu0 %v471
    %1738 = vmatpush1.msra.mxu0 %v470
    %1739 = vmatprep.subr.mxu0 %v467
    %1740 = vmatpush1.msra.mxu0 %v466
    %1741 = vmatprep.subr.mxu0 %v463
    %1742 = vmatpush1.msra.mxu0 %v462
    %1743 = vmatprep.subr.mxu0 %v459
    %1744 = vmatpush1.msra.mxu0 %v458
    %1745 = vmatprep.subr.mxu0 %v455
    %1746 = vmatpush1.msra.mxu0 %v454
    %1747 = vmatprep.subr.mxu0 %v451
    %1748 = vmatpush1.msra.mxu0 %v450
    %1749 = vmatprep.subr.mxu0 %v447
    %1750 = vmatpush1.msra.mxu0 %v446
    %1751 = vmatprep.subr.mxu0 %v443
    %1752 = vmatpush1.msra.mxu0 %v442
    %1753 = vmatprep.subr.mxu0 %v439
    %1754 = vmatpush1.msra.mxu0 %v438
    %1755 = vmatprep.subr.mxu0 %v435
    %1756 = vmatpush1.msra.mxu0 %v434
    %1757 = vmatprep.subr.mxu0 %v431
    %1758 = vmatpush1.msra.mxu0 %v430
    %1759 = vmatprep.subr.mxu0 %v427
    %1760 = vmatpush1.msra.mxu0 %v426
    %1761 = vmatprep.subr.mxu0 %v423
    %1762 = vmatpush1.msra.mxu0 %v422
    %1763 = vmatprep.subr.mxu0 0.0
    %1764 = vmatpush2.msra.mxu0 0.0
    %1765 = vmatprep.subr.mxu0 0.0
    %1766 = vmatpush2.msra.mxu0 0.0
    %1767 = vmatprep.subr.mxu0 0.0
    %1768 = vmatpush2.msra.mxu0 0.0
    %1769 = vmatprep.subr.mxu0 0.0
    %1770 = vmatpush2.msra.mxu0 0.0
    %1771 = vmatprep.subr.mxu0 0.0
    %1772 = vmatpush2.msra.mxu0 0.0
    %1773 = vmatprep.subr.mxu0 0.0
    %1774 = vmatpush2.msra.mxu0 0.0
    %1775 = vmatprep.subr.mxu0 0.0
    %1776 = vmatpush2.msra.mxu0 0.0
    %1777 = vmatprep.subr.mxu0 0.0
    %1778 = vmatpush2.msra.mxu0 0.0
    %1779 = vmatprep.subr.mxu0 0.0
    %1780 = vmatpush2.msra.mxu0 0.0
    %1781 = vmatprep.subr.mxu0 0.0
    %1782 = vmatpush2.msra.mxu0 0.0
    %1783 = vmatprep.subr.mxu0 0.0
    %1784 = vmatpush2.msra.mxu0 0.0
    %1785 = vmatprep.subr.mxu0 0.0
    %1786 = vmatpush2.msra.mxu0 0.0
    %1787 = vmatprep.subr.mxu0 0.0
    %1788 = vmatpush2.msra.mxu0 0.0
    %1789 = vmatprep.subr.mxu0 0.0
    %1790 = vmatpush2.msra.mxu0 0.0
    %1791 = vmatprep.subr.mxu0 0.0
    %1792 = vmatpush2.msra.mxu0 0.0
    %1793 = vmatprep.subr.mxu0 0.0
    %1794 = vmatpush2.msra.mxu0 0.0
    %1795 = vmatprep.mubr.f32.mxu0 0.0
    %1796 = vmatmul.mubr.f32.gmra.mxu0 %v1655
    %v1797 = vpop.f32.mrf.mxu0
    %v1798 = vadd.f32 0.0, %v1797
    %v1799 = vpop.f32.mrf.mxu0
    %v1800 = vadd.f32 0.0, %v1799
    %1801 = vdwg.mxu0
    %v1802 = vadd.f32 %v1656, %v1727
    %v1803 = vadd.f32 %v1657, %v1729
    %v1804 = vadd.f32 %v1658, %v1798
    %v1805 = vadd.f32 %v1659, %v1800
    %v1806 = vmul.f32 %v1802, 0.5
    %v1807 = vmul.f32 %v1803, 0.5
    %v1808 = vmul.f32 %v1804, 0.5
    %v1809 = vtanh.pop %v1806
    %v1810 = vtanh.pop %v1807
    %v1811 = vtanh.pop %v1808
    %v1812 = vadd.f32 %v1809, 1.0
    %v1813 = vadd.f32 %v1810, 1.0
    %v1814 = vadd.f32 %v1811, 1.0
    %v1815 = vmul.f32 %v1812, 0.5
    %v1816 = vmul.f32 %v1813, 0.5
    %v1817 = vmul.f32 %v1814, 0.5
    %v1818 = vtanh.pop %v1805
    %v1819 = vmul.f32 %v1816, %v1653
    %v1820 = vmul.f32 %v1815, %v1818
    %v1821 = vadd.f32 %v1819, %v1820
    %v1822 = vtanh.pop %v1821
    %v1823 = vmul.f32 %v1817, %v1822
    %v1824 = vld [vmem:[#allocation7] sm:$0xff]
    %v1825 = vld [vmem:[#allocation7 + $0x8] sm:$0xff]
    %v1826 = vld [vmem:[#allocation7 + $0x10] sm:$0xff]
    %v1827 = vld [vmem:[#allocation7 + $0x18] sm:$0xff]
    %v1828 = vld [vmem:[#allocation7 + $0x20] sm:$0xff]
    %v1829 = vld [vmem:[#allocation7 + $0x28] sm:$0xff]
    %v1830 = vld [vmem:[#allocation7 + $0x30] sm:$0xff]
    %v1831 = vld [vmem:[#allocation7 + $0x38] sm:$0xff]
    %v1832 = vld [vmem:[#allocation7 + $0x40] sm:$0xff]
    %v1833 = vld [vmem:[#allocation7 + $0x48] sm:$0xff]
    %v1834 = vld [vmem:[#allocation7 + $0x50] sm:$0xff]
    %v1835 = vld [vmem:[#allocation7 + $0x58] sm:$0xff]
    %v1836 = vld [vmem:[#allocation7 + $0x60] sm:$0xff]
    %v1837 = vld [vmem:[#allocation7 + $0x68] sm:$0xff]
    %v1838 = vld [vmem:[#allocation7 + $0x70] sm:$0xff]
    %v1839 = vld [vmem:[#allocation7 + $0x78] sm:$0xff]
    %v1840 = vld [vmem:[%s5] sm:$0x1]
    %v1842 = vlaneseq
    %v1843 = vshrl.u32 %v1842, 7
    %v1844 = vsub.s32 0, %v1843
    %v1845 = vrot.slane %v1840, %v1844
    %1847 = vmatprep.subr.mxu0 0.0
    %1848 = vmatpush1.msra.mxu0 %v1839
    %1849 = vmatprep.subr.mxu0 0.0
    %1850 = vmatpush1.msra.mxu0 %v1838
    %1851 = vmatprep.subr.mxu0 0.0
    %1852 = vmatpush1.msra.mxu0 %v1837
    %1853 = vmatprep.subr.mxu0 0.0
    %1854 = vmatpush1.msra.mxu0 %v1836
    %1855 = vmatprep.subr.mxu0 0.0
    %1856 = vmatpush1.msra.mxu0 %v1835
    %1857 = vmatprep.subr.mxu0 0.0
    %1858 = vmatpush1.msra.mxu0 %v1834
    %1859 = vmatprep.subr.mxu0 0.0
    %1860 = vmatpush1.msra.mxu0 %v1833
    %1861 = vmatprep.subr.mxu0 0.0
    %1862 = vmatpush1.msra.mxu0 %v1832
    %1863 = vmatprep.subr.mxu0 0.0
    %1864 = vmatpush1.msra.mxu0 %v1831
    %1865 = vmatprep.subr.mxu0 0.0
    %1866 = vmatpush1.msra.mxu0 %v1830
    %1867 = vmatprep.subr.mxu0 0.0
    %1868 = vmatpush1.msra.mxu0 %v1829
    %1869 = vmatprep.subr.mxu0 0.0
    %1870 = vmatpush1.msra.mxu0 %v1828
    %1871 = vmatprep.subr.mxu0 0.0
    %1872 = vmatpush1.msra.mxu0 %v1827
    %1873 = vmatprep.subr.mxu0 0.0
    %1874 = vmatpush1.msra.mxu0 %v1826
    %1875 = vmatprep.subr.mxu0 0.0
    %1876 = vmatpush1.msra.mxu0 %v1825
    %1877 = vmatprep.subr.mxu0 0.0
    %1878 = vmatpush1.msra.mxu0 %v1824
    %1879 = vmatprep.subr.mxu0 0.0
    %1880 = vmatpush2.msra.mxu0 0.0
    %1881 = vmatprep.subr.mxu0 0.0
    %1882 = vmatpush2.msra.mxu0 0.0
    %1883 = vmatprep.subr.mxu0 0.0
    %1884 = vmatpush2.msra.mxu0 0.0
    %1885 = vmatprep.subr.mxu0 0.0
    %1886 = vmatpush2.msra.mxu0 0.0
    %1887 = vmatprep.subr.mxu0 0.0
    %1888 = vmatpush2.msra.mxu0 0.0
    %1889 = vmatprep.subr.mxu0 0.0
    %1890 = vmatpush2.msra.mxu0 0.0
    %1891 = vmatprep.subr.mxu0 0.0
    %1892 = vmatpush2.msra.mxu0 0.0
    %1893 = vmatprep.subr.mxu0 0.0
    %1894 = vmatpush2.msra.mxu0 0.0
    %1895 = vmatprep.subr.mxu0 0.0
    %1896 = vmatpush2.msra.mxu0 0.0
    %1897 = vmatprep.subr.mxu0 0.0
    %1898 = vmatpush2.msra.mxu0 0.0
    %1899 = vmatprep.subr.mxu0 0.0
    %1900 = vmatpush2.msra.mxu0 0.0
    %1901 = vmatprep.subr.mxu0 0.0
    %1902 = vmatpush2.msra.mxu0 0.0
    %1903 = vmatprep.subr.mxu0 0.0
    %1904 = vmatpush2.msra.mxu0 0.0
    %1905 = vmatprep.subr.mxu0 0.0
    %1906 = vmatpush2.msra.mxu0 0.0
    %1907 = vmatprep.subr.mxu0 0.0
    %1908 = vmatpush2.msra.mxu0 0.0
    %1909 = vmatprep.subr.mxu0 0.0
    %1910 = vmatpush2.msra.mxu0 0.0
    %1911 = vmatprep.mubr.f32.mxu0 0.0
    %1912 = vmatmul.mubr.f32.gmra.mxu0 %v1823
    %v1913 = vpop.f32.mrf.mxu0
    %v1914 = vadd.f32 %v1845, %v1913
    %v1915 = vpop.f32.mrf.mxu0
    %1916 = vdwg.mxu0
    %1917 = vst [vmem:[%s6] sm:$0xff] %v1914
    // Predicated region
    $region38: #{lstm_forward.1} parent=1 // pred_check
      _
    $region39: #{lstm_forward.1} parent=1 // pred_check_branch
      %1919 = sbr.rel (0) target = $region41
    $region40: #{lstm_forward.1} parent=1 // pred_region
      _
    $region41: #{lstm_forward.1} parent=1 // pred_fallthru
      _
    // Predicated region
    $region42: #{lstm_forward.1} parent=1 // pred_check
      _
    $region43: #{lstm_forward.1} parent=1 // pred_check_branch
      %1921 = sbr.rel (0) target = $region45
    $region44: #{lstm_forward.1} parent=1 // pred_region
      _
    $region45: #{lstm_forward.1} parent=1 // pred_fallthru
      _
    %1922 = vsyncpa [#allocation4], 1
    %1923 = vsyncpa [#allocation6], 1

</llo_original>
